<compile_context>
chip_gen: v7x
topology: tpu7x:2x2x1
jax: 0.10.0
libtpu: 0.0.40
codegen_flags: <defaults>
</compile_context>

<pallas_src>
import functools

import jax
import jax.numpy as jnp
from jax.experimental import pallas as pl
from jax.experimental.pallas import tpu as pltpu

_LANE = 128
_SUBLANE = 8
_NEG_INF = -1e30


def _round_up(x, m):
    return ((x + m - 1) // m) * m


# ---------------------------------------------------------------------------
# Fused kernel: ReLU + multi-layer GRU (all timesteps) + Linear + LogSoftmax
# ---------------------------------------------------------------------------
def fused_decoder_kernel(x_ref, h0_ref, wih_ref, whh_ref, bg_ref, bhn_ref,
                         ow_ref, ob_ref, logp_ref, hN_ref, act_ref,
                         *, seq_len, num_layers, b_pad, h_pad, in_pad):
    """Shapes (all padded, f32):
      x_ref  : (seq*B_pad, IN_pad)        embedded tokens (pre-ReLU)
      h0_ref : (L, B_pad, H_pad)          initial hidden
      wih_ref: (L, IN_pad, 3*H_pad)       W_ih^T, gates in 128-lane blocks (r,z,n)
      whh_ref: (L, H_pad, 3*H_pad)        W_hh^T, same gate layout
      bg_ref : (L, 1, 3*H_pad)            combined bias (bi_r+bh_r, bi_z+bh_z, bi_n)
      bhn_ref: (L, 1, H_pad)              b_hh_n (applied inside the r* term)
      ow_ref : (H_pad, V_pad)             output weight^T
      ob_ref : (1, V_pad)                 output bias (-1e30 in padded lanes)
      logp_ref: (B_pad, V_pad)            log_softmax(Linear(out[0]))
      hN_ref : (L, B_pad, H_pad)          final hidden
      act_ref: (seq*B_pad, IN_pad)        VMEM scratch: next layer's input
    """
    HP, BP = h_pad, b_pad

    # ReLU fused into the input of the hoisted input-to-hidden matmul.
    layer_in = jnp.maximum(x_ref[...], 0.0)                  # (seq*BP, IN_pad)

    # Zero the scratch's pad columns once (only needed when the stacked W_ih
    # row pad exceeds the hidden width, i.e. padded embed > padded hidden).
    if num_layers > 1 and in_pad > HP:
        act_ref[...] = jnp.zeros_like(act_ref)

    out_t0 = None
    for layer in range(num_layers):                          # tiny static trip count
        w_ih = wih_ref[layer]                                # (IN_pad, 3*HP)
        w_hh = whh_ref[layer]                                # (HP, 3*HP)
        bg = bg_ref[layer]                                   # (1, 3*HP)
        bhn = bhn_ref[layer]                                 # (1, HP)

        # Hoisted: input-to-hidden contribution for ALL timesteps at once.
        gi_all = jnp.dot(layer_in, w_ih,
                         preferred_element_type=jnp.float32) + bg

        h = h0_ref[layer]                                    # (BP, HP)
        last = (layer + 1 == num_layers)
        for t in range(seq_len):                             # sequential recurrence
            gi = gi_all[t * BP:(t + 1) * BP, :]              # static sublane slice
            gh = jnp.dot(h, w_hh, preferred_element_type=jnp.float32)
            # Lane-aligned gate blocks (offsets 0, HP, 2*HP with HP = 128*k).
            r = jax.nn.sigmoid(gi[:, 0:HP] + gh[:, 0:HP])
            z = jax.nn.sigmoid(gi[:, HP:2 * HP] + gh[:, HP:2 * HP])
            n = jnp.tanh(gi[:, 2 * HP:3 * HP] + r * (gh[:, 2 * HP:3 * HP] + bhn))
            h = (1.0 - z) * n + z * h
            if last and t == 0:
                out_t0 = h                                   # output[0], last layer
            if not last:                                     # feed next layer
                act_ref[t * BP:(t + 1) * BP, 0:HP] = h

        hN_ref[layer] = h                                    # final hidden, this layer
        if not last:
            layer_in = act_ref[...]                          # (seq*BP, IN_pad)

    # Output head on output[0] of the last layer: Linear + log_softmax(dim=1).
    logits = jnp.dot(out_t0, ow_ref[...],
                     preferred_element_type=jnp.float32) + ob_ref[...]
    m = jnp.max(logits, axis=1, keepdims=True)
    s = logits - m
    logp_ref[...] = s - jnp.log(jnp.sum(jnp.exp(s), axis=1, keepdims=True))


# ---------------------------------------------------------------------------
# Parameter setup
# ---------------------------------------------------------------------------
def init_params(key, hidden_size, output_size, embed_size, num_layers):
    """Natural (PyTorch-layout) parameters: W_ih (3H, in), W_hh (3H, H), ..."""
    keys = jax.random.split(key, 4 + 4 * num_layers)
    scale = 1.0 / jnp.sqrt(hidden_size)

    params = {"embedding": jax.random.normal(
        keys[0], (output_size, embed_size), jnp.float32)}

    w_ih, w_hh, b_ih, b_hh = [], [], [], []
    for layer in range(num_layers):
        in_size = embed_size if layer == 0 else hidden_size
        k = keys[1 + 4 * layer: 1 + 4 * (layer + 1)]
        w_ih.append(jax.random.uniform(
            k[0], (3 * hidden_size, in_size), jnp.float32, -scale, scale))
        w_hh.append(jax.random.uniform(
            k[1], (3 * hidden_size, hidden_size), jnp.float32, -scale, scale))
        b_ih.append(jax.random.uniform(
            k[2], (3 * hidden_size,), jnp.float32, -scale, scale))
        b_hh.append(jax.random.uniform(
            k[3], (3 * hidden_size,), jnp.float32, -scale, scale))
    params["gru_w_ih"], params["gru_w_hh"] = w_ih, w_hh
    params["gru_b_ih"], params["gru_b_hh"] = b_ih, b_hh

    params["out_w"] = jax.random.uniform(
        keys[-2], (output_size, hidden_size), jnp.float32, -scale, scale)
    params["out_b"] = jax.random.uniform(
        keys[-1], (output_size,), jnp.float32, -scale, scale)
    return params


def prepare_kernel_params(params, embed_size, hidden_size, output_size, num_layers):
    """One-time repack: transpose, pad to (8,128)-aligned, lane-aligned gate
    blocks, combined r/z biases.  Done once, outside the hot path."""
    HP = _round_up(max(hidden_size, 1), _LANE)
    EP = _round_up(max(embed_size, 1), _LANE)
    IN_PAD = max(HP, EP)                     # stacked W_ih row width (all layers)
    VP = _round_up(max(output_size, 1), _LANE)

    H = hidden_size

    def pad_gates_t(w, in_size):
        # w: (3H, in_size), PyTorch gate order (r, z, n) -> (IN_PAD, 3*HP)
        blocks = []
        for g in range(3):
            wg = w[g * H:(g + 1) * H, :].T                      # (in, H)
            blocks.append(jnp.zeros((IN_PAD, HP), jnp.float32)
                          .at[:in_size, :H].set(wg))
        return jnp.concatenate(blocks, axis=1)

    def pad_hh_t(w):
        # w: (3H, H) -> (HP, 3*HP)
        blocks = []
        for g in range(3):
            wg = w[g * H:(g + 1) * H, :].T                      # (H, H)
            blocks.append(jnp.zeros((HP, HP), jnp.float32)
                          .at[:H, :H].set(wg))
        return jnp.concatenate(blocks, axis=1)

    def pad_gate_bias(b):
        # b: (3H,) -> (1, 3*HP) with gates in lane-aligned blocks
        blocks = []
        for g in range(3):
            blocks.append(jnp.zeros((HP,), jnp.float32)
                          .at[:H].set(b[g * H:(g + 1) * H]))
        return jnp.concatenate(blocks, axis=0)[None, :]

    wih, whh, bgate, bhn = [], [], [], []
    for layer in range(num_layers):
        in_size = embed_size if layer == 0 else hidden_size
        wih.append(pad_gates_t(params["gru_w_ih"][layer], in_size))
        whh.append(pad_hh_t(params["gru_w_hh"][layer]))
        b_ih = params["gru_b_ih"][layer]
        b_hh = params["gru_b_hh"][layer]
        # r,z biases combined; n keeps only b_ih_n here (b_hh_n goes inside r*).
        b_comb = jnp.concatenate(
            [b_ih[:2 * H] + b_hh[:2 * H], b_ih[2 * H:]], axis=0)
        bgate.append(pad_gate_bias(b_comb))
        bhn.append(jnp.zeros((1, HP), jnp.float32).at[0, :H].set(b_hh[2 * H:]))

    out_w = jnp.zeros((HP, VP), jnp.float32).at[
        :hidden_size, :output_size].set(params["out_w"].T)
    # Padded vocab lanes get -1e30 so they contribute exp(.)=0 to the softmax.
    out_b = jnp.full((1, VP), _NEG_INF, jnp.float32).at[
        0, :output_size].set(params["out_b"])

    return {
        "w_ih": jnp.stack(wih, axis=0),     # (L, IN_PAD, 3*HP)
        "w_hh": jnp.stack(whh, axis=0),     # (L, HP, 3*HP)
        "b_gate": jnp.stack(bgate, axis=0), # (L, 1, 3*HP)
        "b_hn": jnp.stack(bhn, axis=0),     # (L, 1, HP)
        "out_w": out_w,                     # (HP, VP)
        "out_b": out_b,                     # (1, VP)
    }


# ---------------------------------------------------------------------------
# Forward (matches PyTorch Decoder.forward semantics)
# ---------------------------------------------------------------------------
def decoder_forward(params, kparams, token_ids, hidden):
    """token_ids: (seq, batch) int32 ; hidden: (num_layers, batch, H)
    Returns (log_probs (batch, vocab), new_hidden (num_layers, batch, H))."""
    seq_len, batch = token_ids.shape
    num_layers, _, hidden_size = hidden.shape
    output_size, embed_size = params["embedding"].shape

    IN_PAD = kparams["w_ih"].shape[1]
    HP = kparams["w_hh"].shape[1]
    VP = kparams["out_w"].shape[1]
    BP = _round_up(batch, _SUBLANE)

    # Embedding gather (JAX glue) + padding to (8,128)-aligned tiles.
    embedded = params["embedding"][token_ids]                 # (seq, B, E)
    x = jnp.zeros((seq_len, BP, IN_PAD), jnp.float32)
    x = x.at[:, :batch, :embed_size].set(embedded)
    x = x.reshape(seq_len * BP, IN_PAD)

    h0 = jnp.zeros((num_layers, BP, HP), jnp.float32)
    h0 = h0.at[:, :batch, :hidden_size].set(hidden)

    kernel = functools.partial(
        fused_decoder_kernel,
        seq_len=seq_len, num_layers=num_layers,
        b_pad=BP, h_pad=HP, in_pad=IN_PAD)

    vmem = pl.BlockSpec(memory_space=pltpu.MemorySpace.VMEM)
    logp_pad, hN_pad = pl.pallas_call(
        kernel,
        out_shape=(jax.ShapeDtypeStruct((BP, VP), jnp.float32),
                   jax.ShapeDtypeStruct((num_layers, BP, HP), jnp.float32)),
        in_specs=[vmem] * 8,
        out_specs=(vmem, vmem),
        scratch_shapes=[pltpu.VMEM((seq_len * BP, IN_PAD), jnp.float32)],
    )(x, h0, kparams["w_ih"], kparams["w_hh"], kparams["b_gate"],
      kparams["b_hn"], kparams["out_w"], kparams["out_b"])

    return logp_pad[:batch, :output_size], hN_pad[:, :batch, :hidden_size]


# ---------------------------------------------------------------------------
# Pure-JAX reference (mirrors torch.nn.GRU / Linear / LogSoftmax semantics)
# ---------------------------------------------------------------------------
def reference_forward(params, token_ids, hidden):
    seq_len, _ = token_ids.shape
    num_layers, _, H = hidden.shape
    layer_in = jax.nn.relu(params["embedding"][token_ids])    # (seq, B, E)
    new_h = []
    for l in range(num_layers):
        w_ih, w_hh = params["gru_w_ih"][l], params["gru_w_hh"][l]
        b_ih, b_hh = params["gru_b_ih"][l], params["gru_b_hh"][l]
        h = hidden[l]
        outs = []
        for t in range(seq_len):
            gi = layer_in[t] @ w_ih.T + b_ih
            gh = h @ w_hh.T + b_hh
            r = jax.nn.sigmoid(gi[:, :H] + gh[:, :H])
            z = jax.nn.sigmoid(gi[:, H:2 * H] + gh[:, H:2 * H])
            n = jnp.tanh(gi[:, 2 * H:] + r * gh[:, 2 * H:])
            h = (1.0 - z) * n + z * h
            outs.append(h)
        new_h.append(h)
        layer_in = jnp.stack(outs, axis=0)
    logits = layer_in[0] @ params["out_w"].T + params["out_b"]
    return jax.nn.log_softmax(logits, axis=1), jnp.stack(new_h, axis=0)


# ---------------------------------------------------------------------------
if __name__ == "__main__":
    hidden_size = 32
    output_size = 16   # vocab size
    embed_size = 32
    num_layers = 2
    batch = 2
    seq_len = 4

    key = jax.random.PRNGKey(0)
    k_params, k_tok, k_hid = jax.random.split(key, 3)

    params = init_params(k_params, hidden_size, output_size, embed_size, num_layers)
    kparams = prepare_kernel_params(params, embed_size, hidden_size,
                                    output_size, num_layers)

    token_ids = jax.random.randint(k_tok, (seq_len, batch), 0, output_size, jnp.int32)
    hidden0 = jax.random.normal(k_hid, (num_layers, batch, hidden_size), jnp.float32)

    fwd = jax.jit(decoder_forward)
    log_probs, new_hidden = fwd(params, kparams, token_ids, hidden0)
    jax.block_until_ready((log_probs, new_hidden))

    # Correctness checks against a pure-JAX reference.
    ref_lp, ref_h = reference_forward(params, token_ids, hidden0)

    assert log_probs.shape == (batch, output_size)
    assert new_hidden.shape == (num_layers, batch, hidden_size)
    assert bool(jnp.all(jnp.abs(jnp.sum(jnp.exp(log_probs), axis=1) - 1.0) < 1e-4))
    assert bool(jnp.allclose(log_probs, ref_lp, atol=1e-3, rtol=1e-3))
    assert bool(jnp.allclose(new_hidden, ref_h, atol=1e-3, rtol=1e-3))

    print("KERNEL_OK")
</pallas_src>

<mosaic_0001>
module attributes {stable_mosaic.version = 11 : i64} {
  func.func @fused_decoder_kernel(%arg0: memref<32x128xf32, #tpu.memory_space<vmem>>, %arg1: memref<2x8x128xf32, #tpu.memory_space<vmem>>, %arg2: memref<2x128x384xf32, #tpu.memory_space<vmem>>, %arg3: memref<2x128x384xf32, #tpu.memory_space<vmem>>, %arg4: memref<2x1x384xf32, #tpu.memory_space<vmem>>, %arg5: memref<2x1x128xf32, #tpu.memory_space<vmem>>, %arg6: memref<128x128xf32, #tpu.memory_space<vmem>>, %arg7: memref<1x128xf32, #tpu.memory_space<vmem>>, %arg8: memref<8x128xf32, #tpu.memory_space<vmem>>, %arg9: memref<2x8x128xf32, #tpu.memory_space<vmem>>, %arg10: memref<32x128xf32, #tpu.memory_space<vmem>>) attributes {dimension_semantics = [], scalar_prefetch = 0 : i64, scratch_operands = 1 : i64, tpu.core_type = #tpu.core_type<tc>} {
    %c0 = arith.constant 0 : index
    %c0_0 = arith.constant 0 : index
    %0 = vector.load %arg0[%c0, %c0_0] : memref<32x128xf32, #tpu.memory_space<vmem>>, vector<32x128xf32>
    %cst = arith.constant 0.000000e+00 : f32
    %1 = vector.broadcast %cst : f32 to vector<32x128xf32>
    %2 = arith.maximumf %0, %1 : vector<32x128xf32>
    %c0_1 = arith.constant 0 : index
    %c0_2 = arith.constant 0 : index
    %c0_3 = arith.constant 0 : index
    %3 = vector.load %arg2[%c0_1, %c0_2, %c0_3] : memref<2x128x384xf32, #tpu.memory_space<vmem>>, vector<1x128x384xf32>
    %4 = vector.shape_cast %3 : vector<1x128x384xf32> to vector<128x384xf32>
    %c0_4 = arith.constant 0 : index
    %c0_5 = arith.constant 0 : index
    %c0_6 = arith.constant 0 : index
    %5 = vector.load %arg3[%c0_4, %c0_5, %c0_6] : memref<2x128x384xf32, #tpu.memory_space<vmem>>, vector<1x128x384xf32>
    %6 = vector.shape_cast %5 : vector<1x128x384xf32> to vector<128x384xf32>
    %c0_7 = arith.constant 0 : index
    %c0_8 = arith.constant 0 : index
    %c0_9 = arith.constant 0 : index
    %7 = vector.load %arg4[%c0_7, %c0_8, %c0_9] : memref<2x1x384xf32, #tpu.memory_space<vmem>>, vector<1x1x384xf32>
    %8 = vector.shape_cast %7 : vector<1x1x384xf32> to vector<1x384xf32>
    %c0_10 = arith.constant 0 : index
    %c0_11 = arith.constant 0 : index
    %c0_12 = arith.constant 0 : index
    %9 = vector.load %arg5[%c0_10, %c0_11, %c0_12] : memref<2x1x128xf32, #tpu.memory_space<vmem>>, vector<1x1x128xf32>
    %10 = vector.shape_cast %9 : vector<1x1x128xf32> to vector<1x128xf32>
    %cst_13 = arith.constant dense<0.000000e+00> : vector<32x384xf32>
    %11 = tpu.matmul %2, %4, %cst_13 {dimension_numbers = #tpu.dot_dimension_numbers<[1], [0], [0], [1], [0, 0, 1, 1], [], []>} : vector<32x128xf32>, vector<128x384xf32>, vector<32x384xf32> -> vector<32x384xf32>
    %12 = vector.broadcast %8 : vector<1x384xf32> to vector<32x384xf32>
    %13 = arith.addf %11, %12 : vector<32x384xf32>
    %c0_14 = arith.constant 0 : index
    %c0_15 = arith.constant 0 : index
    %c0_16 = arith.constant 0 : index
    %14 = vector.load %arg1[%c0_14, %c0_15, %c0_16] : memref<2x8x128xf32, #tpu.memory_space<vmem>>, vector<1x8x128xf32>
    %15 = vector.shape_cast %14 : vector<1x8x128xf32> to vector<8x128xf32>
    %16 = vector.extract_strided_slice %13 {offsets = [0, 0], sizes = [8, 384], strides = [1, 1]} : vector<32x384xf32> to vector<8x384xf32>
    %cst_17 = arith.constant dense<0.000000e+00> : vector<8x384xf32>
    %17 = tpu.matmul %15, %6, %cst_17 {dimension_numbers = #tpu.dot_dimension_numbers<[1], [0], [0], [1], [0, 0, 1, 1], [], []>} : vector<8x128xf32>, vector<128x384xf32>, vector<8x384xf32> -> vector<8x384xf32>
    %18 = vector.extract_strided_slice %16 {offsets = [0, 0], sizes = [8, 128], strides = [1, 1]} : vector<8x384xf32> to vector<8x128xf32>
    %19 = vector.extract_strided_slice %17 {offsets = [0, 0], sizes = [8, 128], strides = [1, 1]} : vector<8x384xf32> to vector<8x128xf32>
    %20 = arith.addf %18, %19 : vector<8x128xf32>
    %21 = arith.negf %20 : vector<8x128xf32>
    %22 = math.exp %21 : vector<8x128xf32>
    %cst_18 = arith.constant 1.000000e+00 : f32
    %23 = vector.broadcast %cst_18 : f32 to vector<8x128xf32>
    %24 = arith.addf %23, %22 : vector<8x128xf32>
    %25 = arith.divf %23, %24 : vector<8x128xf32>
    %26 = vector.extract_strided_slice %16 {offsets = [0, 128], sizes = [8, 128], strides = [1, 1]} : vector<8x384xf32> to vector<8x128xf32>
    %27 = vector.extract_strided_slice %17 {offsets = [0, 128], sizes = [8, 128], strides = [1, 1]} : vector<8x384xf32> to vector<8x128xf32>
    %28 = arith.addf %26, %27 : vector<8x128xf32>
    %29 = arith.negf %28 : vector<8x128xf32>
    %30 = math.exp %29 : vector<8x128xf32>
    %cst_19 = arith.constant 1.000000e+00 : f32
    %31 = vector.broadcast %cst_19 : f32 to vector<8x128xf32>
    %32 = arith.addf %31, %30 : vector<8x128xf32>
    %33 = arith.divf %31, %32 : vector<8x128xf32>
    %34 = vector.extract_strided_slice %16 {offsets = [0, 256], sizes = [8, 128], strides = [1, 1]} : vector<8x384xf32> to vector<8x128xf32>
    %35 = vector.extract_strided_slice %17 {offsets = [0, 256], sizes = [8, 128], strides = [1, 1]} : vector<8x384xf32> to vector<8x128xf32>
    %36 = vector.broadcast %10 : vector<1x128xf32> to vector<8x128xf32>
    %37 = arith.addf %35, %36 : vector<8x128xf32>
    %38 = arith.mulf %25, %37 : vector<8x128xf32>
    %39 = arith.addf %34, %38 : vector<8x128xf32>
    %40 = math.tanh %39 : vector<8x128xf32>
    %cst_20 = arith.constant 1.000000e+00 : f32
    %41 = vector.broadcast %cst_20 : f32 to vector<8x128xf32>
    %42 = arith.subf %41, %33 : vector<8x128xf32>
    %43 = arith.mulf %42, %40 : vector<8x128xf32>
    %44 = arith.mulf %33, %15 : vector<8x128xf32>
    %45 = arith.addf %43, %44 : vector<8x128xf32>
    %c0_21 = arith.constant 0 : index
    %c0_22 = arith.constant 0 : index
    %46 = vector.load %arg10[%c0_21, %c0_22] : memref<32x128xf32, #tpu.memory_space<vmem>>, vector<8x128xf32>
    tpu.vector_store %arg10[%c0_21, %c0_22], %45 {strides = array<i32>} : memref<32x128xf32, #tpu.memory_space<vmem>>, vector<8x128xf32>,
    %47 = vector.extract_strided_slice %13 {offsets = [8, 0], sizes = [8, 384], strides = [1, 1]} : vector<32x384xf32> to vector<8x384xf32>
    %cst_23 = arith.constant dense<0.000000e+00> : vector<8x384xf32>
    %48 = tpu.matmul %45, %6, %cst_23 {dimension_numbers = #tpu.dot_dimension_numbers<[1], [0], [0], [1], [0, 0, 1, 1], [], []>} : vector<8x128xf32>, vector<128x384xf32>, vector<8x384xf32> -> vector<8x384xf32>
    %49 = vector.extract_strided_slice %47 {offsets = [0, 0], sizes = [8, 128], strides = [1, 1]} : vector<8x384xf32> to vector<8x128xf32>
    %50 = vector.extract_strided_slice %48 {offsets = [0, 0], sizes = [8, 128], strides = [1, 1]} : vector<8x384xf32> to vector<8x128xf32>
    %51 = arith.addf %49, %50 : vector<8x128xf32>
    %52 = arith.negf %51 : vector<8x128xf32>
    %53 = math.exp %52 : vector<8x128xf32>
    %cst_24 = arith.constant 1.000000e+00 : f32
    %54 = vector.broadcast %cst_24 : f32 to vector<8x128xf32>
    %55 = arith.addf %54, %53 : vector<8x128xf32>
    %56 = arith.divf %54, %55 : vector<8x128xf32>
    %57 = vector.extract_strided_slice %47 {offsets = [0, 128], sizes = [8, 128], strides = [1, 1]} : vector<8x384xf32> to vector<8x128xf32>
    %58 = vector.extract_strided_slice %48 {offsets = [0, 128], sizes = [8, 128], strides = [1, 1]} : vector<8x384xf32> to vector<8x128xf32>
    %59 = arith.addf %57, %58 : vector<8x128xf32>
    %60 = arith.negf %59 : vector<8x128xf32>
    %61 = math.exp %60 : vector<8x128xf32>
    %cst_25 = arith.constant 1.000000e+00 : f32
    %62 = vector.broadcast %cst_25 : f32 to vector<8x128xf32>
    %63 = arith.addf %62, %61 : vector<8x128xf32>
    %64 = arith.divf %62, %63 : vector<8x128xf32>
    %65 = vector.extract_strided_slice %47 {offsets = [0, 256], sizes = [8, 128], strides = [1, 1]} : vector<8x384xf32> to vector<8x128xf32>
    %66 = vector.extract_strided_slice %48 {offsets = [0, 256], sizes = [8, 128], strides = [1, 1]} : vector<8x384xf32> to vector<8x128xf32>
    %67 = vector.broadcast %10 : vector<1x128xf32> to vector<8x128xf32>
    %68 = arith.addf %66, %67 : vector<8x128xf32>
    %69 = arith.mulf %56, %68 : vector<8x128xf32>
    %70 = arith.addf %65, %69 : vector<8x128xf32>
    %71 = math.tanh %70 : vector<8x128xf32>
    %cst_26 = arith.constant 1.000000e+00 : f32
    %72 = vector.broadcast %cst_26 : f32 to vector<8x128xf32>
    %73 = arith.subf %72, %64 : vector<8x128xf32>
    %74 = arith.mulf %73, %71 : vector<8x128xf32>
    %75 = arith.mulf %64, %45 : vector<8x128xf32>
    %76 = arith.addf %74, %75 : vector<8x128xf32>
    %c8 = arith.constant 8 : index
    %c0_27 = arith.constant 0 : index
    %77 = vector.load %arg10[%c8, %c0_27] : memref<32x128xf32, #tpu.memory_space<vmem>>, vector<8x128xf32>
    tpu.vector_store %arg10[%c8, %c0_27], %76 {strides = array<i32>} : memref<32x128xf32, #tpu.memory_space<vmem>>, vector<8x128xf32>,
    %78 = vector.extract_strided_slice %13 {offsets = [16, 0], sizes = [8, 384], strides = [1, 1]} : vector<32x384xf32> to vector<8x384xf32>
    %cst_28 = arith.constant dense<0.000000e+00> : vector<8x384xf32>
    %79 = tpu.matmul %76, %6, %cst_28 {dimension_numbers = #tpu.dot_dimension_numbers<[1], [0], [0], [1], [0, 0, 1, 1], [], []>} : vector<8x128xf32>, vector<128x384xf32>, vector<8x384xf32> -> vector<8x384xf32>
    %80 = vector.extract_strided_slice %78 {offsets = [0, 0], sizes = [8, 128], strides = [1, 1]} : vector<8x384xf32> to vector<8x128xf32>
    %81 = vector.extract_strided_slice %79 {offsets = [0, 0], sizes = [8, 128], strides = [1, 1]} : vector<8x384xf32> to vector<8x128xf32>
    %82 = arith.addf %80, %81 : vector<8x128xf32>
    %83 = arith.negf %82 : vector<8x128xf32>
    %84 = math.exp %83 : vector<8x128xf32>
    %cst_29 = arith.constant 1.000000e+00 : f32
    %85 = vector.broadcast %cst_29 : f32 to vector<8x128xf32>
    %86 = arith.addf %85, %84 : vector<8x128xf32>
    %87 = arith.divf %85, %86 : vector<8x128xf32>
    %88 = vector.extract_strided_slice %78 {offsets = [0, 128], sizes = [8, 128], strides = [1, 1]} : vector<8x384xf32> to vector<8x128xf32>
    %89 = vector.extract_strided_slice %79 {offsets = [0, 128], sizes = [8, 128], strides = [1, 1]} : vector<8x384xf32> to vector<8x128xf32>
    %90 = arith.addf %88, %89 : vector<8x128xf32>
    %91 = arith.negf %90 : vector<8x128xf32>
    %92 = math.exp %91 : vector<8x128xf32>
    %cst_30 = arith.constant 1.000000e+00 : f32
    %93 = vector.broadcast %cst_30 : f32 to vector<8x128xf32>
    %94 = arith.addf %93, %92 : vector<8x128xf32>
    %95 = arith.divf %93, %94 : vector<8x128xf32>
    %96 = vector.extract_strided_slice %78 {offsets = [0, 256], sizes = [8, 128], strides = [1, 1]} : vector<8x384xf32> to vector<8x128xf32>
    %97 = vector.extract_strided_slice %79 {offsets = [0, 256], sizes = [8, 128], strides = [1, 1]} : vector<8x384xf32> to vector<8x128xf32>
    %98 = vector.broadcast %10 : vector<1x128xf32> to vector<8x128xf32>
    %99 = arith.addf %97, %98 : vector<8x128xf32>
    %100 = arith.mulf %87, %99 : vector<8x128xf32>
    %101 = arith.addf %96, %100 : vector<8x128xf32>
    %102 = math.tanh %101 : vector<8x128xf32>
    %cst_31 = arith.constant 1.000000e+00 : f32
    %103 = vector.broadcast %cst_31 : f32 to vector<8x128xf32>
    %104 = arith.subf %103, %95 : vector<8x128xf32>
    %105 = arith.mulf %104, %102 : vector<8x128xf32>
    %106 = arith.mulf %95, %76 : vector<8x128xf32>
    %107 = arith.addf %105, %106 : vector<8x128xf32>
    %c16 = arith.constant 16 : index
    %c0_32 = arith.constant 0 : index
    %108 = vector.load %arg10[%c16, %c0_32] : memref<32x128xf32, #tpu.memory_space<vmem>>, vector<8x128xf32>
    tpu.vector_store %arg10[%c16, %c0_32], %107 {strides = array<i32>} : memref<32x128xf32, #tpu.memory_space<vmem>>, vector<8x128xf32>,
    %109 = vector.extract_strided_slice %13 {offsets = [24, 0], sizes = [8, 384], strides = [1, 1]} : vector<32x384xf32> to vector<8x384xf32>
    %cst_33 = arith.constant dense<0.000000e+00> : vector<8x384xf32>
    %110 = tpu.matmul %107, %6, %cst_33 {dimension_numbers = #tpu.dot_dimension_numbers<[1], [0], [0], [1], [0, 0, 1, 1], [], []>} : vector<8x128xf32>, vector<128x384xf32>, vector<8x384xf32> -> vector<8x384xf32>
    %111 = vector.extract_strided_slice %109 {offsets = [0, 0], sizes = [8, 128], strides = [1, 1]} : vector<8x384xf32> to vector<8x128xf32>
    %112 = vector.extract_strided_slice %110 {offsets = [0, 0], sizes = [8, 128], strides = [1, 1]} : vector<8x384xf32> to vector<8x128xf32>
    %113 = arith.addf %111, %112 : vector<8x128xf32>
    %114 = arith.negf %113 : vector<8x128xf32>
    %115 = math.exp %114 : vector<8x128xf32>
    %cst_34 = arith.constant 1.000000e+00 : f32
    %116 = vector.broadcast %cst_34 : f32 to vector<8x128xf32>
    %117 = arith.addf %116, %115 : vector<8x128xf32>
    %118 = arith.divf %116, %117 : vector<8x128xf32>
    %119 = vector.extract_strided_slice %109 {offsets = [0, 128], sizes = [8, 128], strides = [1, 1]} : vector<8x384xf32> to vector<8x128xf32>
    %120 = vector.extract_strided_slice %110 {offsets = [0, 128], sizes = [8, 128], strides = [1, 1]} : vector<8x384xf32> to vector<8x128xf32>
    %121 = arith.addf %119, %120 : vector<8x128xf32>
    %122 = arith.negf %121 : vector<8x128xf32>
    %123 = math.exp %122 : vector<8x128xf32>
    %cst_35 = arith.constant 1.000000e+00 : f32
    %124 = vector.broadcast %cst_35 : f32 to vector<8x128xf32>
    %125 = arith.addf %124, %123 : vector<8x128xf32>
    %126 = arith.divf %124, %125 : vector<8x128xf32>
    %127 = vector.extract_strided_slice %109 {offsets = [0, 256], sizes = [8, 128], strides = [1, 1]} : vector<8x384xf32> to vector<8x128xf32>
    %128 = vector.extract_strided_slice %110 {offsets = [0, 256], sizes = [8, 128], strides = [1, 1]} : vector<8x384xf32> to vector<8x128xf32>
    %129 = vector.broadcast %10 : vector<1x128xf32> to vector<8x128xf32>
    %130 = arith.addf %128, %129 : vector<8x128xf32>
    %131 = arith.mulf %118, %130 : vector<8x128xf32>
    %132 = arith.addf %127, %131 : vector<8x128xf32>
    %133 = math.tanh %132 : vector<8x128xf32>
    %cst_36 = arith.constant 1.000000e+00 : f32
    %134 = vector.broadcast %cst_36 : f32 to vector<8x128xf32>
    %135 = arith.subf %134, %126 : vector<8x128xf32>
    %136 = arith.mulf %135, %133 : vector<8x128xf32>
    %137 = arith.mulf %126, %107 : vector<8x128xf32>
    %138 = arith.addf %136, %137 : vector<8x128xf32>
    %c24 = arith.constant 24 : index
    %c0_37 = arith.constant 0 : index
    %139 = vector.load %arg10[%c24, %c0_37] : memref<32x128xf32, #tpu.memory_space<vmem>>, vector<8x128xf32>
    tpu.vector_store %arg10[%c24, %c0_37], %138 {strides = array<i32>} : memref<32x128xf32, #tpu.memory_space<vmem>>, vector<8x128xf32>,
    %c0_38 = arith.constant 0 : index
    %c0_39 = arith.constant 0 : index
    %c0_40 = arith.constant 0 : index
    %140 = vector.load %arg9[%c0_38, %c0_39, %c0_40] : memref<2x8x128xf32, #tpu.memory_space<vmem>>, vector<1x8x128xf32>
    %141 = vector.shape_cast %140 : vector<1x8x128xf32> to vector<8x128xf32>
    %142 = vector.shape_cast %138 : vector<8x128xf32> to vector<1x8x128xf32>
    tpu.vector_store %arg9[%c0_38, %c0_39, %c0_40], %142 {strides = array<i32>} : memref<2x8x128xf32, #tpu.memory_space<vmem>>, vector<1x8x128xf32>,
    %c0_41 = arith.constant 0 : index
    %c0_42 = arith.constant 0 : index
    %143 = vector.load %arg10[%c0_41, %c0_42] : memref<32x128xf32, #tpu.memory_space<vmem>>, vector<32x128xf32>
    %c1 = arith.constant 1 : index
    %c0_43 = arith.constant 0 : index
    %c0_44 = arith.constant 0 : index
    %144 = vector.load %arg2[%c1, %c0_43, %c0_44] : memref<2x128x384xf32, #tpu.memory_space<vmem>>, vector<1x128x384xf32>
    %145 = vector.shape_cast %144 : vector<1x128x384xf32> to vector<128x384xf32>
    %c1_45 = arith.constant 1 : index
    %c0_46 = arith.constant 0 : index
    %c0_47 = arith.constant 0 : index
    %146 = vector.load %arg3[%c1_45, %c0_46, %c0_47] : memref<2x128x384xf32, #tpu.memory_space<vmem>>, vector<1x128x384xf32>
    %147 = vector.shape_cast %146 : vector<1x128x384xf32> to vector<128x384xf32>
    %c1_48 = arith.constant 1 : index
    %c0_49 = arith.constant 0 : index
    %c0_50 = arith.constant 0 : index
    %148 = vector.load %arg4[%c1_48, %c0_49, %c0_50] : memref<2x1x384xf32, #tpu.memory_space<vmem>>, vector<1x1x384xf32>
    %149 = vector.shape_cast %148 : vector<1x1x384xf32> to vector<1x384xf32>
    %c1_51 = arith.constant 1 : index
    %c0_52 = arith.constant 0 : index
    %c0_53 = arith.constant 0 : index
    %150 = vector.load %arg5[%c1_51, %c0_52, %c0_53] : memref<2x1x128xf32, #tpu.memory_space<vmem>>, vector<1x1x128xf32>
    %151 = vector.shape_cast %150 : vector<1x1x128xf32> to vector<1x128xf32>
    %cst_54 = arith.constant dense<0.000000e+00> : vector<32x384xf32>
    %152 = tpu.matmul %143, %145, %cst_54 {dimension_numbers = #tpu.dot_dimension_numbers<[1], [0], [0], [1], [0, 0, 1, 1], [], []>} : vector<32x128xf32>, vector<128x384xf32>, vector<32x384xf32> -> vector<32x384xf32>
    %153 = vector.broadcast %149 : vector<1x384xf32> to vector<32x384xf32>
    %154 = arith.addf %152, %153 : vector<32x384xf32>
    %c1_55 = arith.constant 1 : index
    %c0_56 = arith.constant 0 : index
    %c0_57 = arith.constant 0 : index
    %155 = vector.load %arg1[%c1_55, %c0_56, %c0_57] : memref<2x8x128xf32, #tpu.memory_space<vmem>>, vector<1x8x128xf32>
    %156 = vector.shape_cast %155 : vector<1x8x128xf32> to vector<8x128xf32>
    %157 = vector.extract_strided_slice %154 {offsets = [0, 0], sizes = [8, 384], strides = [1, 1]} : vector<32x384xf32> to vector<8x384xf32>
    %cst_58 = arith.constant dense<0.000000e+00> : vector<8x384xf32>
    %158 = tpu.matmul %156, %147, %cst_58 {dimension_numbers = #tpu.dot_dimension_numbers<[1], [0], [0], [1], [0, 0, 1, 1], [], []>} : vector<8x128xf32>, vector<128x384xf32>, vector<8x384xf32> -> vector<8x384xf32>
    %159 = vector.extract_strided_slice %157 {offsets = [0, 0], sizes = [8, 128], strides = [1, 1]} : vector<8x384xf32> to vector<8x128xf32>
    %160 = vector.extract_strided_slice %158 {offsets = [0, 0], sizes = [8, 128], strides = [1, 1]} : vector<8x384xf32> to vector<8x128xf32>
    %161 = arith.addf %159, %160 : vector<8x128xf32>
    %162 = arith.negf %161 : vector<8x128xf32>
    %163 = math.exp %162 : vector<8x128xf32>
    %cst_59 = arith.constant 1.000000e+00 : f32
    %164 = vector.broadcast %cst_59 : f32 to vector<8x128xf32>
    %165 = arith.addf %164, %163 : vector<8x128xf32>
    %166 = arith.divf %164, %165 : vector<8x128xf32>
    %167 = vector.extract_strided_slice %157 {offsets = [0, 128], sizes = [8, 128], strides = [1, 1]} : vector<8x384xf32> to vector<8x128xf32>
    %168 = vector.extract_strided_slice %158 {offsets = [0, 128], sizes = [8, 128], strides = [1, 1]} : vector<8x384xf32> to vector<8x128xf32>
    %169 = arith.addf %167, %168 : vector<8x128xf32>
    %170 = arith.negf %169 : vector<8x128xf32>
    %171 = math.exp %170 : vector<8x128xf32>
    %cst_60 = arith.constant 1.000000e+00 : f32
    %172 = vector.broadcast %cst_60 : f32 to vector<8x128xf32>
    %173 = arith.addf %172, %171 : vector<8x128xf32>
    %174 = arith.divf %172, %173 : vector<8x128xf32>
    %175 = vector.extract_strided_slice %157 {offsets = [0, 256], sizes = [8, 128], strides = [1, 1]} : vector<8x384xf32> to vector<8x128xf32>
    %176 = vector.extract_strided_slice %158 {offsets = [0, 256], sizes = [8, 128], strides = [1, 1]} : vector<8x384xf32> to vector<8x128xf32>
    %177 = vector.broadcast %151 : vector<1x128xf32> to vector<8x128xf32>
    %178 = arith.addf %176, %177 : vector<8x128xf32>
    %179 = arith.mulf %166, %178 : vector<8x128xf32>
    %180 = arith.addf %175, %179 : vector<8x128xf32>
    %181 = math.tanh %180 : vector<8x128xf32>
    %cst_61 = arith.constant 1.000000e+00 : f32
    %182 = vector.broadcast %cst_61 : f32 to vector<8x128xf32>
    %183 = arith.subf %182, %174 : vector<8x128xf32>
    %184 = arith.mulf %183, %181 : vector<8x128xf32>
    %185 = arith.mulf %174, %156 : vector<8x128xf32>
    %186 = arith.addf %184, %185 : vector<8x128xf32>
    %187 = vector.extract_strided_slice %154 {offsets = [8, 0], sizes = [8, 384], strides = [1, 1]} : vector<32x384xf32> to vector<8x384xf32>
    %cst_62 = arith.constant dense<0.000000e+00> : vector<8x384xf32>
    %188 = tpu.matmul %186, %147, %cst_62 {dimension_numbers = #tpu.dot_dimension_numbers<[1], [0], [0], [1], [0, 0, 1, 1], [], []>} : vector<8x128xf32>, vector<128x384xf32>, vector<8x384xf32> -> vector<8x384xf32>
    %189 = vector.extract_strided_slice %187 {offsets = [0, 0], sizes = [8, 128], strides = [1, 1]} : vector<8x384xf32> to vector<8x128xf32>
    %190 = vector.extract_strided_slice %188 {offsets = [0, 0], sizes = [8, 128], strides = [1, 1]} : vector<8x384xf32> to vector<8x128xf32>
    %191 = arith.addf %189, %190 : vector<8x128xf32>
    %192 = arith.negf %191 : vector<8x128xf32>
    %193 = math.exp %192 : vector<8x128xf32>
    %cst_63 = arith.constant 1.000000e+00 : f32
    %194 = vector.broadcast %cst_63 : f32 to vector<8x128xf32>
    %195 = arith.addf %194, %193 : vector<8x128xf32>
    %196 = arith.divf %194, %195 : vector<8x128xf32>
    %197 = vector.extract_strided_slice %187 {offsets = [0, 128], sizes = [8, 128], strides = [1, 1]} : vector<8x384xf32> to vector<8x128xf32>
    %198 = vector.extract_strided_slice %188 {offsets = [0, 128], sizes = [8, 128], strides = [1, 1]} : vector<8x384xf32> to vector<8x128xf32>
    %199 = arith.addf %197, %198 : vector<8x128xf32>
    %200 = arith.negf %199 : vector<8x128xf32>
    %201 = math.exp %200 : vector<8x128xf32>
    %cst_64 = arith.constant 1.000000e+00 : f32
    %202 = vector.broadcast %cst_64 : f32 to vector<8x128xf32>
    %203 = arith.addf %202, %201 : vector<8x128xf32>
    %204 = arith.divf %202, %203 : vector<8x128xf32>
    %205 = vector.extract_strided_slice %187 {offsets = [0, 256], sizes = [8, 128], strides = [1, 1]} : vector<8x384xf32> to vector<8x128xf32>
    %206 = vector.extract_strided_slice %188 {offsets = [0, 256], sizes = [8, 128], strides = [1, 1]} : vector<8x384xf32> to vector<8x128xf32>
    %207 = vector.broadcast %151 : vector<1x128xf32> to vector<8x128xf32>
    %208 = arith.addf %206, %207 : vector<8x128xf32>
    %209 = arith.mulf %196, %208 : vector<8x128xf32>
    %210 = arith.addf %205, %209 : vector<8x128xf32>
    %211 = math.tanh %210 : vector<8x128xf32>
    %cst_65 = arith.constant 1.000000e+00 : f32
    %212 = vector.broadcast %cst_65 : f32 to vector<8x128xf32>
    %213 = arith.subf %212, %204 : vector<8x128xf32>
    %214 = arith.mulf %213, %211 : vector<8x128xf32>
    %215 = arith.mulf %204, %186 : vector<8x128xf32>
    %216 = arith.addf %214, %215 : vector<8x128xf32>
    %217 = vector.extract_strided_slice %154 {offsets = [16, 0], sizes = [8, 384], strides = [1, 1]} : vector<32x384xf32> to vector<8x384xf32>
    %cst_66 = arith.constant dense<0.000000e+00> : vector<8x384xf32>
    %218 = tpu.matmul %216, %147, %cst_66 {dimension_numbers = #tpu.dot_dimension_numbers<[1], [0], [0], [1], [0, 0, 1, 1], [], []>} : vector<8x128xf32>, vector<128x384xf32>, vector<8x384xf32> -> vector<8x384xf32>
    %219 = vector.extract_strided_slice %217 {offsets = [0, 0], sizes = [8, 128], strides = [1, 1]} : vector<8x384xf32> to vector<8x128xf32>
    %220 = vector.extract_strided_slice %218 {offsets = [0, 0], sizes = [8, 128], strides = [1, 1]} : vector<8x384xf32> to vector<8x128xf32>
    %221 = arith.addf %219, %220 : vector<8x128xf32>
    %222 = arith.negf %221 : vector<8x128xf32>
    %223 = math.exp %222 : vector<8x128xf32>
    %cst_67 = arith.constant 1.000000e+00 : f32
    %224 = vector.broadcast %cst_67 : f32 to vector<8x128xf32>
    %225 = arith.addf %224, %223 : vector<8x128xf32>
    %226 = arith.divf %224, %225 : vector<8x128xf32>
    %227 = vector.extract_strided_slice %217 {offsets = [0, 128], sizes = [8, 128], strides = [1, 1]} : vector<8x384xf32> to vector<8x128xf32>
    %228 = vector.extract_strided_slice %218 {offsets = [0, 128], sizes = [8, 128], strides = [1, 1]} : vector<8x384xf32> to vector<8x128xf32>
    %229 = arith.addf %227, %228 : vector<8x128xf32>
    %230 = arith.negf %229 : vector<8x128xf32>
    %231 = math.exp %230 : vector<8x128xf32>
    %cst_68 = arith.constant 1.000000e+00 : f32
    %232 = vector.broadcast %cst_68 : f32 to vector<8x128xf32>
    %233 = arith.addf %232, %231 : vector<8x128xf32>
    %234 = arith.divf %232, %233 : vector<8x128xf32>
    %235 = vector.extract_strided_slice %217 {offsets = [0, 256], sizes = [8, 128], strides = [1, 1]} : vector<8x384xf32> to vector<8x128xf32>
    %236 = vector.extract_strided_slice %218 {offsets = [0, 256], sizes = [8, 128], strides = [1, 1]} : vector<8x384xf32> to vector<8x128xf32>
    %237 = vector.broadcast %151 : vector<1x128xf32> to vector<8x128xf32>
    %238 = arith.addf %236, %237 : vector<8x128xf32>
    %239 = arith.mulf %226, %238 : vector<8x128xf32>
    %240 = arith.addf %235, %239 : vector<8x128xf32>
    %241 = math.tanh %240 : vector<8x128xf32>
    %cst_69 = arith.constant 1.000000e+00 : f32
    %242 = vector.broadcast %cst_69 : f32 to vector<8x128xf32>
    %243 = arith.subf %242, %234 : vector<8x128xf32>
    %244 = arith.mulf %243, %241 : vector<8x128xf32>
    %245 = arith.mulf %234, %216 : vector<8x128xf32>
    %246 = arith.addf %244, %245 : vector<8x128xf32>
    %247 = vector.extract_strided_slice %154 {offsets = [24, 0], sizes = [8, 384], strides = [1, 1]} : vector<32x384xf32> to vector<8x384xf32>
    %cst_70 = arith.constant dense<0.000000e+00> : vector<8x384xf32>
    %248 = tpu.matmul %246, %147, %cst_70 {dimension_numbers = #tpu.dot_dimension_numbers<[1], [0], [0], [1], [0, 0, 1, 1], [], []>} : vector<8x128xf32>, vector<128x384xf32>, vector<8x384xf32> -> vector<8x384xf32>
    %249 = vector.extract_strided_slice %247 {offsets = [0, 0], sizes = [8, 128], strides = [1, 1]} : vector<8x384xf32> to vector<8x128xf32>
    %250 = vector.extract_strided_slice %248 {offsets = [0, 0], sizes = [8, 128], strides = [1, 1]} : vector<8x384xf32> to vector<8x128xf32>
    %251 = arith.addf %249, %250 : vector<8x128xf32>
    %252 = arith.negf %251 : vector<8x128xf32>
    %253 = math.exp %252 : vector<8x128xf32>
    %cst_71 = arith.constant 1.000000e+00 : f32
    %254 = vector.broadcast %cst_71 : f32 to vector<8x128xf32>
    %255 = arith.addf %254, %253 : vector<8x128xf32>
    %256 = arith.divf %254, %255 : vector<8x128xf32>
    %257 = vector.extract_strided_slice %247 {offsets = [0, 128], sizes = [8, 128], strides = [1, 1]} : vector<8x384xf32> to vector<8x128xf32>
    %258 = vector.extract_strided_slice %248 {offsets = [0, 128], sizes = [8, 128], strides = [1, 1]} : vector<8x384xf32> to vector<8x128xf32>
    %259 = arith.addf %257, %258 : vector<8x128xf32>
    %260 = arith.negf %259 : vector<8x128xf32>
    %261 = math.exp %260 : vector<8x128xf32>
    %cst_72 = arith.constant 1.000000e+00 : f32
    %262 = vector.broadcast %cst_72 : f32 to vector<8x128xf32>
    %263 = arith.addf %262, %261 : vector<8x128xf32>
    %264 = arith.divf %262, %263 : vector<8x128xf32>
    %265 = vector.extract_strided_slice %247 {offsets = [0, 256], sizes = [8, 128], strides = [1, 1]} : vector<8x384xf32> to vector<8x128xf32>
    %266 = vector.extract_strided_slice %248 {offsets = [0, 256], sizes = [8, 128], strides = [1, 1]} : vector<8x384xf32> to vector<8x128xf32>
    %267 = vector.broadcast %151 : vector<1x128xf32> to vector<8x128xf32>
    %268 = arith.addf %266, %267 : vector<8x128xf32>
    %269 = arith.mulf %256, %268 : vector<8x128xf32>
    %270 = arith.addf %265, %269 : vector<8x128xf32>
    %271 = math.tanh %270 : vector<8x128xf32>
    %cst_73 = arith.constant 1.000000e+00 : f32
    %272 = vector.broadcast %cst_73 : f32 to vector<8x128xf32>
    %273 = arith.subf %272, %264 : vector<8x128xf32>
    %274 = arith.mulf %273, %271 : vector<8x128xf32>
    %275 = arith.mulf %264, %246 : vector<8x128xf32>
    %276 = arith.addf %274, %275 : vector<8x128xf32>
    %c1_74 = arith.constant 1 : index
    %c0_75 = arith.constant 0 : index
    %c0_76 = arith.constant 0 : index
    %277 = vector.load %arg9[%c1_74, %c0_75, %c0_76] : memref<2x8x128xf32, #tpu.memory_space<vmem>>, vector<1x8x128xf32>
    %278 = vector.shape_cast %277 : vector<1x8x128xf32> to vector<8x128xf32>
    %279 = vector.shape_cast %276 : vector<8x128xf32> to vector<1x8x128xf32>
    tpu.vector_store %arg9[%c1_74, %c0_75, %c0_76], %279 {strides = array<i32>} : memref<2x8x128xf32, #tpu.memory_space<vmem>>, vector<1x8x128xf32>,
    %c0_77 = arith.constant 0 : index
    %c0_78 = arith.constant 0 : index
    %280 = vector.load %arg6[%c0_77, %c0_78] : memref<128x128xf32, #tpu.memory_space<vmem>>, vector<128x128xf32>
    %cst_79 = arith.constant dense<0.000000e+00> : vector<8x128xf32>
    %281 = tpu.matmul %186, %280, %cst_79 {dimension_numbers = #tpu.dot_dimension_numbers<[1], [0], [0], [1], [0, 0, 1, 1], [], []>} : vector<8x128xf32>, vector<128x128xf32>, vector<8x128xf32> -> vector<8x128xf32>
    %c0_80 = arith.constant 0 : index
    %c0_81 = arith.constant 0 : index
    %282 = vector.load %arg7[%c0_80, %c0_81] : memref<1x128xf32, #tpu.memory_space<vmem>>, vector<1x128xf32>
    %283 = vector.broadcast %282 : vector<1x128xf32> to vector<8x128xf32>
    %284 = arith.addf %281, %283 : vector<8x128xf32>
    %cst_82 = arith.constant dense<0xFF800000> : vector<8xf32>
    %285 = vector.multi_reduction <maximumf>, %284, %cst_82 [1] : vector<8x128xf32> to vector<8xf32>
    %286 = vector.shape_cast %285 : vector<8xf32> to vector<8x1xf32>
    %287 = vector.broadcast %286 : vector<8x1xf32> to vector<8x128xf32>
    %288 = arith.subf %284, %287 : vector<8x128xf32>
    %289 = math.exp %288 : vector<8x128xf32>
    %cst_83 = arith.constant dense<0.000000e+00> : vector<8xf32>
    %290 = vector.multi_reduction <add>, %289, %cst_83 [1] : vector<8x128xf32> to vector<8xf32>
    %291 = vector.shape_cast %290 : vector<8xf32> to vector<8x1xf32>
    %292 = math.log %291 : vector<8x1xf32>
    %293 = vector.broadcast %292 : vector<8x1xf32> to vector<8x128xf32>
    %294 = arith.subf %288, %293 : vector<8x128xf32>
    %c0_84 = arith.constant 0 : index
    %c0_85 = arith.constant 0 : index
    %295 = vector.load %arg8[%c0_84, %c0_85] : memref<8x128xf32, #tpu.memory_space<vmem>>, vector<8x128xf32>
    tpu.vector_store %arg8[%c0_84, %c0_85], %294 {strides = array<i32>} : memref<8x128xf32, #tpu.memory_space<vmem>>, vector<8x128xf32>,
    return
  }
}

</mosaic_0001>

<llo_original>
// kernel: decoder_forward.1
$region0: #{decoder_forward.1}
  #allocation0 [shape = 'u32[]', space=smem, size = 0x4, offset = 0x4, fixed_abs, tag = 'smem constant byte address 0x4 - core index']
  #allocation1 [shape = 'u32[144,128]{1,0:T(1,128)}', space=vmem, size = 0x12000, scoped, tag = 'internal scratch']
  #allocation2 [shape = 'f32[32,128]{1,0:T(8,128)}', space=vmem, size = 0x4000, scoped, tag = 'scratch operand']
  %s0 = inlined_call_operand.vmem [shape: f32[32,128], index: 0, kind: input, shape index: {}]
  %s1 = inlined_call_operand.vmem [shape: f32[2,8,128], index: 1, kind: input, shape index: {}]
  %s2 = inlined_call_operand.hbm [shape: f32[2,128,384], index: 2, kind: input, shape index: {}]
  %s3 = inlined_call_operand.hbm [shape: f32[2,128,384], index: 3, kind: input, shape index: {}]
  %s4 = inlined_call_operand.vmem [shape: f32[2,1,384], index: 4, kind: input, shape index: {}]
  %s5 = inlined_call_operand.vmem [shape: f32[2,1,128], index: 5, kind: input, shape index: {}]
  %s6 = inlined_call_operand.vmem [shape: f32[128,128], index: 6, kind: input, shape index: {}]
  %s7 = inlined_call_operand.vmem [shape: f32[1,128], index: 7, kind: input, shape index: {}]
  %s8 = inlined_call_operand.vmem [shape: f32[8,128], index: 8, kind: output, shape index: {0}]
  %s9 = inlined_call_operand.vmem [shape: f32[2,8,128], index: 9, kind: output, shape index: {1}]
  %10 = xla_tuple %s8, %s9
  %s11 = sld [smem:[#allocation0]]
  $region58: #{decoder_forward.1} parent=0
    _
  %s13 = ssub.s32 1, %s11
  %s14 = scalar_select 0, %s13, %s11
  $region1: #{decoder_forward.1} parent=0
    #allocation3 [shape = 'u8[393216]{0}', space=vmem, size = 0x60000, scoped, tag = 'input window, operand 2, single buffered']
    #allocation4 [shape = 's32[1]{0}', space=sflag, size = 0x4, scoped, tag = 'scoped memory for decoder_forward.1']
    #allocation5 [shape = 'u8[393216]{0}', space=vmem, size = 0x60000, scoped, tag = 'input window, operand 3, single buffered']
    #allocation6 [shape = 's32[1]{0}', space=sflag, size = 0x4, scoped, tag = 'scoped memory for decoder_forward.1']
    %15 = vsyncpa [#allocation4], 0
    %16 = vsyncpa [#allocation6], 0
    // Predicated region
    $region2: #{decoder_forward.1} parent=1 // pred_check
      _
    $region3: #{decoder_forward.1} parent=1 // pred_check_branch
      %18 = sbr.rel (0) target = $region5
    $region4: #{decoder_forward.1} parent=1 // pred_region
      _
    $region5: #{decoder_forward.1} parent=1 // pred_fallthru
      _
    // Predicated region
    $region6: #{decoder_forward.1} parent=1 // pred_check
      _
    $region7: #{decoder_forward.1} parent=1 // pred_check_branch
      %20 = sbr.rel (0) target = $region9
    $region8: #{decoder_forward.1} parent=1 // pred_region
      _
    $region9: #{decoder_forward.1} parent=1 // pred_fallthru
      _
    // Predicated region
    $region10: #{decoder_forward.1} parent=1 // pred_check
      _
    $region11: #{decoder_forward.1} parent=1 // pred_check_branch
      %22 = sbr.rel (0) target = $region13
    $region12: #{decoder_forward.1} parent=1 // pred_region
      %s24 = ssub.s32 12288, 12288
      %25 = vsyncadd [#allocation4], %s24
      %s26 = sshll.u32 [#allocation3], 4
      %s27 = int_to_ptr.vmem [resolvable:$true] %s26
      %32 = dma.hbm_to_vmem [thread:$0]  %s2, 12288, %s27, [#allocation4], 384, 384, 24
    $region13: #{decoder_forward.1} parent=1 // pred_fallthru
      _
    // Predicated region
    $region14: #{decoder_forward.1} parent=1 // pred_check
      _
    $region15: #{decoder_forward.1} parent=1 // pred_check_branch
      %34 = sbr.rel (0) target = $region17
    $region16: #{decoder_forward.1} parent=1 // pred_region
      %s36 = ssub.s32 12288, 12288
      %37 = vsyncadd [#allocation6], %s36
      %s38 = sshll.u32 [#allocation5], 4
      %s39 = int_to_ptr.vmem [resolvable:$true] %s38
      %44 = dma.hbm_to_vmem [thread:$0]  %s3, 12288, %s39, [#allocation6], 384, 384, 24
    $region17: #{decoder_forward.1} parent=1 // pred_fallthru
      _
    // Predicated region
    $region18: #{decoder_forward.1} parent=1 // pred_check
      _
    $region19: #{decoder_forward.1} parent=1 // pred_check_branch
      %46 = sbr.rel (0) target = $region21
    $region20: #{decoder_forward.1} parent=1 // pred_region
      _
    $region21: #{decoder_forward.1} parent=1 // pred_fallthru
      _
    // Predicated region
    $region22: #{decoder_forward.1} parent=1 // pred_check
      _
    $region23: #{decoder_forward.1} parent=1 // pred_check_branch
      %48 = sbr.rel (0) target = $region25
    $region24: #{decoder_forward.1} parent=1 // pred_region
      _
    $region25: #{decoder_forward.1} parent=1 // pred_fallthru
      _
    // Predicated region
    $region26: #{decoder_forward.1} parent=1 // pred_check
      _
    $region27: #{decoder_forward.1} parent=1 // pred_check_branch
      %50 = sbr.rel (0) target = $region29
    $region28: #{decoder_forward.1} parent=1 // pred_region
      _
    $region29: #{decoder_forward.1} parent=1 // pred_fallthru
      _
    // Predicated region
    $region30: #{decoder_forward.1} parent=1 // pred_check
      _
    $region31: #{decoder_forward.1} parent=1 // pred_check_branch
      %52 = sbr.rel (0) target = $region33
    $region32: #{decoder_forward.1} parent=1 // pred_region
      _
    $region33: #{decoder_forward.1} parent=1 // pred_fallthru
      _
    // Predicated region
    $region34: #{decoder_forward.1} parent=1 // pred_check
      _
    $region35: #{decoder_forward.1} parent=1 // pred_check_branch
      %54 = sbr.rel (0) target = $region37
    $region36: #{decoder_forward.1} parent=1 // pred_region
      %55 = dma.done [#allocation4], 12288
    $region37: #{decoder_forward.1} parent=1 // pred_fallthru
      _
    // Predicated region
    $region38: #{decoder_forward.1} parent=1 // pred_check
      _
    $region39: #{decoder_forward.1} parent=1 // pred_check_branch
      %57 = sbr.rel (0) target = $region41
    $region40: #{decoder_forward.1} parent=1 // pred_region
      %58 = dma.done [#allocation6], 12288
    $region41: #{decoder_forward.1} parent=1 // pred_fallthru
      _
    %v59 = vld [vmem:[%s0] sm:$0xff]
    %v60 = vld [vmem:[%s0 + $0x8] sm:$0xff]
    %v61 = vld [vmem:[%s0 + $0x10] sm:$0xff]
    %v62 = vld [vmem:[%s0 + $0x18] sm:$0xff]
    %v63 = vmax.f32 %v59, 0.0
    %v64 = vmax.f32 %v60, 0.0
    %v65 = vmax.f32 %v61, 0.0
    %v66 = vmax.f32 %v62, 0.0
    %v67 = vld [vmem:[#allocation3] sm:$0xff]
    %v68 = vld [vmem:[#allocation3 + $0x8] sm:$0xff]
    %v69 = vld [vmem:[#allocation3 + $0x10] sm:$0xff]
    %v70 = vld [vmem:[#allocation3 + $0x18] sm:$0xff]
    %v71 = vld [vmem:[#allocation3 + $0x20] sm:$0xff]
    %v72 = vld [vmem:[#allocation3 + $0x28] sm:$0xff]
    %v73 = vld [vmem:[#allocation3 + $0x30] sm:$0xff]
    %v74 = vld [vmem:[#allocation3 + $0x38] sm:$0xff]
    %v75 = vld [vmem:[#allocation3 + $0x40] sm:$0xff]
    %v76 = vld [vmem:[#allocation3 + $0x48] sm:$0xff]
    %v77 = vld [vmem:[#allocation3 + $0x50] sm:$0xff]
    %v78 = vld [vmem:[#allocation3 + $0x58] sm:$0xff]
    %v79 = vld [vmem:[#allocation3 + $0x60] sm:$0xff]
    %v80 = vld [vmem:[#allocation3 + $0x68] sm:$0xff]
    %v81 = vld [vmem:[#allocation3 + $0x70] sm:$0xff]
    %v82 = vld [vmem:[#allocation3 + $0x78] sm:$0xff]
    %v83 = vld [vmem:[#allocation3 + $0x80] sm:$0xff]
    %v84 = vld [vmem:[#allocation3 + $0x88] sm:$0xff]
    %v85 = vld [vmem:[#allocation3 + $0x90] sm:$0xff]
    %v86 = vld [vmem:[#allocation3 + $0x98] sm:$0xff]
    %v87 = vld [vmem:[#allocation3 + $0xa0] sm:$0xff]
    %v88 = vld [vmem:[#allocation3 + $0xa8] sm:$0xff]
    %v89 = vld [vmem:[#allocation3 + $0xb0] sm:$0xff]
    %v90 = vld [vmem:[#allocation3 + $0xb8] sm:$0xff]
    %v91 = vld [vmem:[#allocation3 + $0xc0] sm:$0xff]
    %v92 = vld [vmem:[#allocation3 + $0xc8] sm:$0xff]
    %v93 = vld [vmem:[#allocation3 + $0xd0] sm:$0xff]
    %v94 = vld [vmem:[#allocation3 + $0xd8] sm:$0xff]
    %v95 = vld [vmem:[#allocation3 + $0xe0] sm:$0xff]
    %v96 = vld [vmem:[#allocation3 + $0xe8] sm:$0xff]
    %v97 = vld [vmem:[#allocation3 + $0xf0] sm:$0xff]
    %v98 = vld [vmem:[#allocation3 + $0xf8] sm:$0xff]
    %v99 = vld [vmem:[#allocation3 + $0x100] sm:$0xff]
    %v100 = vld [vmem:[#allocation3 + $0x108] sm:$0xff]
    %v101 = vld [vmem:[#allocation3 + $0x110] sm:$0xff]
    %v102 = vld [vmem:[#allocation3 + $0x118] sm:$0xff]
    %v103 = vld [vmem:[#allocation3 + $0x120] sm:$0xff]
    %v104 = vld [vmem:[#allocation3 + $0x128] sm:$0xff]
    %v105 = vld [vmem:[#allocation3 + $0x130] sm:$0xff]
    %v106 = vld [vmem:[#allocation3 + $0x138] sm:$0xff]
    %v107 = vld [vmem:[#allocation3 + $0x140] sm:$0xff]
    %v108 = vld [vmem:[#allocation3 + $0x148] sm:$0xff]
    %v109 = vld [vmem:[#allocation3 + $0x150] sm:$0xff]
    %v110 = vld [vmem:[#allocation3 + $0x158] sm:$0xff]
    %v111 = vld [vmem:[#allocation3 + $0x160] sm:$0xff]
    %v112 = vld [vmem:[#allocation3 + $0x168] sm:$0xff]
    %v113 = vld [vmem:[#allocation3 + $0x170] sm:$0xff]
    %v114 = vld [vmem:[#allocation3 + $0x178] sm:$0xff]
    %v115 = vld [vmem:[#allocation5] sm:$0xff]
    %v116 = vld [vmem:[#allocation5 + $0x8] sm:$0xff]
    %v117 = vld [vmem:[#allocation5 + $0x10] sm:$0xff]
    %v118 = vld [vmem:[#allocation5 + $0x18] sm:$0xff]
    %v119 = vld [vmem:[#allocation5 + $0x20] sm:$0xff]
    %v120 = vld [vmem:[#allocation5 + $0x28] sm:$0xff]
    %v121 = vld [vmem:[#allocation5 + $0x30] sm:$0xff]
    %v122 = vld [vmem:[#allocation5 + $0x38] sm:$0xff]
    %v123 = vld [vmem:[#allocation5 + $0x40] sm:$0xff]
    %v124 = vld [vmem:[#allocation5 + $0x48] sm:$0xff]
    %v125 = vld [vmem:[#allocation5 + $0x50] sm:$0xff]
    %v126 = vld [vmem:[#allocation5 + $0x58] sm:$0xff]
    %v127 = vld [vmem:[#allocation5 + $0x60] sm:$0xff]
    %v128 = vld [vmem:[#allocation5 + $0x68] sm:$0xff]
    %v129 = vld [vmem:[#allocation5 + $0x70] sm:$0xff]
    %v130 = vld [vmem:[#allocation5 + $0x78] sm:$0xff]
    %v131 = vld [vmem:[#allocation5 + $0x80] sm:$0xff]
    %v132 = vld [vmem:[#allocation5 + $0x88] sm:$0xff]
    %v133 = vld [vmem:[#allocation5 + $0x90] sm:$0xff]
    %v134 = vld [vmem:[#allocation5 + $0x98] sm:$0xff]
    %v135 = vld [vmem:[#allocation5 + $0xa0] sm:$0xff]
    %v136 = vld [vmem:[#allocation5 + $0xa8] sm:$0xff]
    %v137 = vld [vmem:[#allocation5 + $0xb0] sm:$0xff]
    %v138 = vld [vmem:[#allocation5 + $0xb8] sm:$0xff]
    %v139 = vld [vmem:[#allocation5 + $0xc0] sm:$0xff]
    %v140 = vld [vmem:[#allocation5 + $0xc8] sm:$0xff]
    %v141 = vld [vmem:[#allocation5 + $0xd0] sm:$0xff]
    %v142 = vld [vmem:[#allocation5 + $0xd8] sm:$0xff]
    %v143 = vld [vmem:[#allocation5 + $0xe0] sm:$0xff]
    %v144 = vld [vmem:[#allocation5 + $0xe8] sm:$0xff]
    %v145 = vld [vmem:[#allocation5 + $0xf0] sm:$0xff]
    %v146 = vld [vmem:[#allocation5 + $0xf8] sm:$0xff]
    %v147 = vld [vmem:[#allocation5 + $0x100] sm:$0xff]
    %v148 = vld [vmem:[#allocation5 + $0x108] sm:$0xff]
    %v149 = vld [vmem:[#allocation5 + $0x110] sm:$0xff]
    %v150 = vld [vmem:[#allocation5 + $0x118] sm:$0xff]
    %v151 = vld [vmem:[#allocation5 + $0x120] sm:$0xff]
    %v152 = vld [vmem:[#allocation5 + $0x128] sm:$0xff]
    %v153 = vld [vmem:[#allocation5 + $0x130] sm:$0xff]
    %v154 = vld [vmem:[#allocation5 + $0x138] sm:$0xff]
    %v155 = vld [vmem:[#allocation5 + $0x140] sm:$0xff]
    %v156 = vld [vmem:[#allocation5 + $0x148] sm:$0xff]
    %v157 = vld [vmem:[#allocation5 + $0x150] sm:$0xff]
    %v158 = vld [vmem:[#allocation5 + $0x158] sm:$0xff]
    %v159 = vld [vmem:[#allocation5 + $0x160] sm:$0xff]
    %v160 = vld [vmem:[#allocation5 + $0x168] sm:$0xff]
    %v161 = vld [vmem:[#allocation5 + $0x170] sm:$0xff]
    %v162 = vld [vmem:[#allocation5 + $0x178] sm:$0xff]
    %v163 = vld [vmem:[%s4] sm:$0x7]
    %v164 = vld [vmem:[%s5] sm:$0x1]
    %v166 = vlaneseq
    %v167 = vshrl.u32 %v166, 7
    %v168 = vsub.s32 0, %v167
    %v169 = vrot.slane %v163, %v168
    %v170 = vlaneseq
    %v171 = vshrl.u32 %v170, 7
    %v172 = vsub.s32 1, %v171
    %v173 = vrot.slane %v163, %v172
    %v174 = vlaneseq
    %v175 = vshrl.u32 %v174, 7
    %v176 = vsub.s32 2, %v175
    %v177 = vrot.slane %v163, %v176
    %181 = vmatprep.subr.mxu0 %v68
    %182 = vmatpush1.msra.mxu0 %v67
    %183 = vmatprep.subr.mxu0 %v71
    %184 = vmatpush1.msra.mxu0 %v70
    %185 = vmatprep.subr.mxu0 %v74
    %186 = vmatpush1.msra.mxu0 %v73
    %187 = vmatprep.subr.mxu0 %v77
    %188 = vmatpush1.msra.mxu0 %v76
    %189 = vmatprep.subr.mxu0 %v80
    %190 = vmatpush1.msra.mxu0 %v79
    %191 = vmatprep.subr.mxu0 %v83
    %192 = vmatpush1.msra.mxu0 %v82
    %193 = vmatprep.subr.mxu0 %v86
    %194 = vmatpush1.msra.mxu0 %v85
    %195 = vmatprep.subr.mxu0 %v89
    %196 = vmatpush1.msra.mxu0 %v88
    %197 = vmatprep.subr.mxu0 %v92
    %198 = vmatpush1.msra.mxu0 %v91
    %199 = vmatprep.subr.mxu0 %v95
    %200 = vmatpush1.msra.mxu0 %v94
    %201 = vmatprep.subr.mxu0 %v98
    %202 = vmatpush1.msra.mxu0 %v97
    %203 = vmatprep.subr.mxu0 %v101
    %204 = vmatpush1.msra.mxu0 %v100
    %205 = vmatprep.subr.mxu0 %v104
    %206 = vmatpush1.msra.mxu0 %v103
    %207 = vmatprep.subr.mxu0 %v107
    %208 = vmatpush1.msra.mxu0 %v106
    %209 = vmatprep.subr.mxu0 %v110
    %210 = vmatpush1.msra.mxu0 %v109
    %211 = vmatprep.subr.mxu0 %v113
    %212 = vmatpush1.msra.mxu0 %v112
    %213 = vmatprep.subr.mxu0 0.0
    %214 = vmatpush1.msra.mxu0 0.0
    %215 = vmatprep.subr.mxu0 0.0
    %216 = vmatpush1.msra.mxu0 0.0
    %217 = vmatprep.subr.mxu0 0.0
    %218 = vmatpush1.msra.mxu0 0.0
    %219 = vmatprep.subr.mxu0 0.0
    %220 = vmatpush1.msra.mxu0 0.0
    %221 = vmatprep.subr.mxu0 0.0
    %222 = vmatpush1.msra.mxu0 0.0
    %223 = vmatprep.subr.mxu0 0.0
    %224 = vmatpush1.msra.mxu0 0.0
    %225 = vmatprep.subr.mxu0 0.0
    %226 = vmatpush1.msra.mxu0 0.0
    %227 = vmatprep.subr.mxu0 0.0
    %228 = vmatpush1.msra.mxu0 0.0
    %229 = vmatprep.subr.mxu0 0.0
    %230 = vmatpush1.msra.mxu0 0.0
    %231 = vmatprep.subr.mxu0 0.0
    %232 = vmatpush1.msra.mxu0 0.0
    %233 = vmatprep.subr.mxu0 0.0
    %234 = vmatpush1.msra.mxu0 0.0
    %235 = vmatprep.subr.mxu0 0.0
    %236 = vmatpush1.msra.mxu0 0.0
    %237 = vmatprep.subr.mxu0 0.0
    %238 = vmatpush1.msra.mxu0 0.0
    %239 = vmatprep.subr.mxu0 0.0
    %240 = vmatpush1.msra.mxu0 0.0
    %241 = vmatprep.subr.mxu0 0.0
    %242 = vmatpush1.msra.mxu0 0.0
    %243 = vmatprep.subr.mxu0 0.0
    %244 = vmatpush1.msra.mxu0 0.0
    %245 = vmatprep.mubr.f32.mxu0 0.0
    %246 = vmatmul.mubr.f32.gmra.mrb[0].mxu0 %v63
    %v247 = vpop.f32.mrb[0].mxu0
    %v248 = vadd.f32 %v169, %v247
    %v249 = vpop.f32.mrb[0].mxu0
    %v250 = vadd.f32 %v173, %v249
    %251 = vmatprep.mubr.f32.mxu0 0.0
    %252 = vmatmul.mubr.f32.gmra.mrb[0].mxu0 %v64
    %v253 = vpop.f32.mrb[0].mxu0
    %v254 = vadd.f32 %v169, %v253
    %v255 = vpop.f32.mrb[0].mxu0
    %v256 = vadd.f32 %v173, %v255
    %257 = vmatprep.mubr.f32.mxu0 0.0
    %258 = vmatmul.mubr.f32.gmra.mrb[0].mxu0 %v65
    %v259 = vpop.f32.mrb[0].mxu0
    %v260 = vadd.f32 %v169, %v259
    %v261 = vpop.f32.mrb[0].mxu0
    %v262 = vadd.f32 %v173, %v261
    %263 = vmatprep.mubr.f32.mxu0 0.0
    %264 = vmatmul.mubr.f32.gmra.mrb[0].mxu0 %v66
    %v265 = vpop.f32.mrb[0].mxu0
    %v266 = vadd.f32 %v169, %v265
    %v267 = vpop.f32.mrb[0].mxu0
    %v268 = vadd.f32 %v173, %v267
    %269 = vdwg.mxu0
    %270 = vmatprep.subr.mxu0 0.0
    %271 = vmatpush1.msra.mxu0 %v69
    %272 = vmatprep.subr.mxu0 0.0
    %273 = vmatpush1.msra.mxu0 %v72
    %274 = vmatprep.subr.mxu0 0.0
    %275 = vmatpush1.msra.mxu0 %v75
    %276 = vmatprep.subr.mxu0 0.0
    %277 = vmatpush1.msra.mxu0 %v78
    %278 = vmatprep.subr.mxu0 0.0
    %279 = vmatpush1.msra.mxu0 %v81
    %280 = vmatprep.subr.mxu0 0.0
    %281 = vmatpush1.msra.mxu0 %v84
    %282 = vmatprep.subr.mxu0 0.0
    %283 = vmatpush1.msra.mxu0 %v87
    %284 = vmatprep.subr.mxu0 0.0
    %285 = vmatpush1.msra.mxu0 %v90
    %286 = vmatprep.subr.mxu0 0.0
    %287 = vmatpush1.msra.mxu0 %v93
    %288 = vmatprep.subr.mxu0 0.0
    %289 = vmatpush1.msra.mxu0 %v96
    %290 = vmatprep.subr.mxu0 0.0
    %291 = vmatpush1.msra.mxu0 %v99
    %292 = vmatprep.subr.mxu0 0.0
    %293 = vmatpush1.msra.mxu0 %v102
    %294 = vmatprep.subr.mxu0 0.0
    %295 = vmatpush1.msra.mxu0 %v105
    %296 = vmatprep.subr.mxu0 0.0
    %297 = vmatpush1.msra.mxu0 %v108
    %298 = vmatprep.subr.mxu0 0.0
    %299 = vmatpush1.msra.mxu0 %v111
    %300 = vmatprep.subr.mxu0 0.0
    %301 = vmatpush1.msra.mxu0 %v114
    %302 = vmatprep.subr.mxu0 0.0
    %303 = vmatpush1.msra.mxu0 0.0
    %304 = vmatprep.subr.mxu0 0.0
    %305 = vmatpush1.msra.mxu0 0.0
    %306 = vmatprep.subr.mxu0 0.0
    %307 = vmatpush1.msra.mxu0 0.0
    %308 = vmatprep.subr.mxu0 0.0
    %309 = vmatpush1.msra.mxu0 0.0
    %310 = vmatprep.subr.mxu0 0.0
    %311 = vmatpush1.msra.mxu0 0.0
    %312 = vmatprep.subr.mxu0 0.0
    %313 = vmatpush1.msra.mxu0 0.0
    %314 = vmatprep.subr.mxu0 0.0
    %315 = vmatpush1.msra.mxu0 0.0
    %316 = vmatprep.subr.mxu0 0.0
    %317 = vmatpush1.msra.mxu0 0.0
    %318 = vmatprep.subr.mxu0 0.0
    %319 = vmatpush1.msra.mxu0 0.0
    %320 = vmatprep.subr.mxu0 0.0
    %321 = vmatpush1.msra.mxu0 0.0
    %322 = vmatprep.subr.mxu0 0.0
    %323 = vmatpush1.msra.mxu0 0.0
    %324 = vmatprep.subr.mxu0 0.0
    %325 = vmatpush1.msra.mxu0 0.0
    %326 = vmatprep.subr.mxu0 0.0
    %327 = vmatpush1.msra.mxu0 0.0
    %328 = vmatprep.subr.mxu0 0.0
    %329 = vmatpush1.msra.mxu0 0.0
    %330 = vmatprep.subr.mxu0 0.0
    %331 = vmatpush1.msra.mxu0 0.0
    %332 = vmatprep.subr.mxu0 0.0
    %333 = vmatpush1.msra.mxu0 0.0
    %334 = vmatprep.mubr.f32.mxu0 0.0
    %335 = vmatmul.mubr.f32.gmra.mrb[0].mxu0 %v63
    %v336 = vpop.f32.mrb[0].mxu0
    %v337 = vadd.f32 %v177, %v336
    %v338 = vpop.f32.mrb[0].mxu0
    %339 = vmatprep.mubr.f32.mxu0 0.0
    %340 = vmatmul.mubr.f32.gmra.mrb[0].mxu0 %v64
    %v341 = vpop.f32.mrb[0].mxu0
    %v342 = vadd.f32 %v177, %v341
    %v343 = vpop.f32.mrb[0].mxu0
    %344 = vmatprep.mubr.f32.mxu0 0.0
    %345 = vmatmul.mubr.f32.gmra.mrb[0].mxu0 %v65
    %v346 = vpop.f32.mrb[0].mxu0
    %v347 = vadd.f32 %v177, %v346
    %v348 = vpop.f32.mrb[0].mxu0
    %349 = vmatprep.mubr.f32.mxu0 0.0
    %350 = vmatmul.mubr.f32.gmra.mrb[0].mxu0 %v66
    %v351 = vpop.f32.mrb[0].mxu0
    %v352 = vadd.f32 %v177, %v351
    %v353 = vpop.f32.mrb[0].mxu0
    %354 = vdwg.mxu0
    %v355 = vld [vmem:[%s1] sm:$0xff]
    %356 = vmatprep.subr.mxu0 %v116
    %357 = vmatpush1.msra.mxu0 %v115
    %358 = vmatprep.subr.mxu0 %v119
    %359 = vmatpush1.msra.mxu0 %v118
    %360 = vmatprep.subr.mxu0 %v122
    %361 = vmatpush1.msra.mxu0 %v121
    %362 = vmatprep.subr.mxu0 %v125
    %363 = vmatpush1.msra.mxu0 %v124
    %364 = vmatprep.subr.mxu0 %v128
    %365 = vmatpush1.msra.mxu0 %v127
    %366 = vmatprep.subr.mxu0 %v131
    %367 = vmatpush1.msra.mxu0 %v130
    %368 = vmatprep.subr.mxu0 %v134
    %369 = vmatpush1.msra.mxu0 %v133
    %370 = vmatprep.subr.mxu0 %v137
    %371 = vmatpush1.msra.mxu0 %v136
    %372 = vmatprep.subr.mxu0 %v140
    %373 = vmatpush1.msra.mxu0 %v139
    %374 = vmatprep.subr.mxu0 %v143
    %375 = vmatpush1.msra.mxu0 %v142
    %376 = vmatprep.subr.mxu0 %v146
    %377 = vmatpush1.msra.mxu0 %v145
    %378 = vmatprep.subr.mxu0 %v149
    %379 = vmatpush1.msra.mxu0 %v148
    %380 = vmatprep.subr.mxu0 %v152
    %381 = vmatpush1.msra.mxu0 %v151
    %382 = vmatprep.subr.mxu0 %v155
    %383 = vmatpush1.msra.mxu0 %v154
    %384 = vmatprep.subr.mxu0 %v158
    %385 = vmatpush1.msra.mxu0 %v157
    %386 = vmatprep.subr.mxu0 %v161
    %387 = vmatpush1.msra.mxu0 %v160
    %388 = vmatprep.subr.mxu0 0.0
    %389 = vmatpush1.msra.mxu0 0.0
    %390 = vmatprep.subr.mxu0 0.0
    %391 = vmatpush1.msra.mxu0 0.0
    %392 = vmatprep.subr.mxu0 0.0
    %393 = vmatpush1.msra.mxu0 0.0
    %394 = vmatprep.subr.mxu0 0.0
    %395 = vmatpush1.msra.mxu0 0.0
    %396 = vmatprep.subr.mxu0 0.0
    %397 = vmatpush1.msra.mxu0 0.0
    %398 = vmatprep.subr.mxu0 0.0
    %399 = vmatpush1.msra.mxu0 0.0
    %400 = vmatprep.subr.mxu0 0.0
    %401 = vmatpush1.msra.mxu0 0.0
    %402 = vmatprep.subr.mxu0 0.0
    %403 = vmatpush1.msra.mxu0 0.0
    %404 = vmatprep.subr.mxu0 0.0
    %405 = vmatpush1.msra.mxu0 0.0
    %406 = vmatprep.subr.mxu0 0.0
    %407 = vmatpush1.msra.mxu0 0.0
    %408 = vmatprep.subr.mxu0 0.0
    %409 = vmatpush1.msra.mxu0 0.0
    %410 = vmatprep.subr.mxu0 0.0
    %411 = vmatpush1.msra.mxu0 0.0
    %412 = vmatprep.subr.mxu0 0.0
    %413 = vmatpush1.msra.mxu0 0.0
    %414 = vmatprep.subr.mxu0 0.0
    %415 = vmatpush1.msra.mxu0 0.0
    %416 = vmatprep.subr.mxu0 0.0
    %417 = vmatpush1.msra.mxu0 0.0
    %418 = vmatprep.subr.mxu0 0.0
    %419 = vmatpush1.msra.mxu0 0.0
    %420 = vmatprep.mubr.f32.mxu0 0.0
    %421 = vmatmul.mubr.f32.gmra.mrb[0].mxu0 %v355
    %v422 = vpop.f32.mrb[0].mxu0
    %v423 = vadd.f32 0.0, %v422
    %v424 = vpop.f32.mrb[0].mxu0
    %v425 = vadd.f32 0.0, %v424
    %426 = vdwg.mxu0
    %427 = vmatprep.subr.mxu0 0.0
    %428 = vmatpush1.msra.mxu0 %v117
    %429 = vmatprep.subr.mxu0 0.0
    %430 = vmatpush1.msra.mxu0 %v120
    %431 = vmatprep.subr.mxu0 0.0
    %432 = vmatpush1.msra.mxu0 %v123
    %433 = vmatprep.subr.mxu0 0.0
    %434 = vmatpush1.msra.mxu0 %v126
    %435 = vmatprep.subr.mxu0 0.0
    %436 = vmatpush1.msra.mxu0 %v129
    %437 = vmatprep.subr.mxu0 0.0
    %438 = vmatpush1.msra.mxu0 %v132
    %439 = vmatprep.subr.mxu0 0.0
    %440 = vmatpush1.msra.mxu0 %v135
    %441 = vmatprep.subr.mxu0 0.0
    %442 = vmatpush1.msra.mxu0 %v138
    %443 = vmatprep.subr.mxu0 0.0
    %444 = vmatpush1.msra.mxu0 %v141
    %445 = vmatprep.subr.mxu0 0.0
    %446 = vmatpush1.msra.mxu0 %v144
    %447 = vmatprep.subr.mxu0 0.0
    %448 = vmatpush1.msra.mxu0 %v147
    %449 = vmatprep.subr.mxu0 0.0
    %450 = vmatpush1.msra.mxu0 %v150
    %451 = vmatprep.subr.mxu0 0.0
    %452 = vmatpush1.msra.mxu0 %v153
    %453 = vmatprep.subr.mxu0 0.0
    %454 = vmatpush1.msra.mxu0 %v156
    %455 = vmatprep.subr.mxu0 0.0
    %456 = vmatpush1.msra.mxu0 %v159
    %457 = vmatprep.subr.mxu0 0.0
    %458 = vmatpush1.msra.mxu0 %v162
    %459 = vmatprep.subr.mxu0 0.0
    %460 = vmatpush1.msra.mxu0 0.0
    %461 = vmatprep.subr.mxu0 0.0
    %462 = vmatpush1.msra.mxu0 0.0
    %463 = vmatprep.subr.mxu0 0.0
    %464 = vmatpush1.msra.mxu0 0.0
    %465 = vmatprep.subr.mxu0 0.0
    %466 = vmatpush1.msra.mxu0 0.0
    %467 = vmatprep.subr.mxu0 0.0
    %468 = vmatpush1.msra.mxu0 0.0
    %469 = vmatprep.subr.mxu0 0.0
    %470 = vmatpush1.msra.mxu0 0.0
    %471 = vmatprep.subr.mxu0 0.0
    %472 = vmatpush1.msra.mxu0 0.0
    %473 = vmatprep.subr.mxu0 0.0
    %474 = vmatpush1.msra.mxu0 0.0
    %475 = vmatprep.subr.mxu0 0.0
    %476 = vmatpush1.msra.mxu0 0.0
    %477 = vmatprep.subr.mxu0 0.0
    %478 = vmatpush1.msra.mxu0 0.0
    %479 = vmatprep.subr.mxu0 0.0
    %480 = vmatpush1.msra.mxu0 0.0
    %481 = vmatprep.subr.mxu0 0.0
    %482 = vmatpush1.msra.mxu0 0.0
    %483 = vmatprep.subr.mxu0 0.0
    %484 = vmatpush1.msra.mxu0 0.0
    %485 = vmatprep.subr.mxu0 0.0
    %486 = vmatpush1.msra.mxu0 0.0
    %487 = vmatprep.subr.mxu0 0.0
    %488 = vmatpush1.msra.mxu0 0.0
    %489 = vmatprep.subr.mxu0 0.0
    %490 = vmatpush1.msra.mxu0 0.0
    %491 = vmatprep.mubr.f32.mxu0 0.0
    %492 = vmatmul.mubr.f32.gmra.mrb[0].mxu0 %v355
    %v493 = vpop.f32.mrb[0].mxu0
    %v494 = vadd.f32 0.0, %v493
    %v495 = vpop.f32.mrb[0].mxu0
    %496 = vdwg.mxu0
    %v497 = vadd.f32 %v248, %v423
    %v498 = vxor.u32 %v497, 2147483648
    %v499 = vmul.f32 %v498, 1.442695
    %v500 = vpow.pop %v499
    %v501 = vadd.f32 %v500, 1.0
    %v502 = vrcp.pop %v501
    %v503 = vmul.f32 1.0, %v502
    %v504 = vadd.f32 %v250, %v425
    %v505 = vxor.u32 %v504, 2147483648
    %v506 = vmul.f32 %v505, 1.442695
    %v507 = vpow.pop %v506
    %v508 = vadd.f32 %v507, 1.0
    %v509 = vrcp.pop %v508
    %v510 = vmul.f32 1.0, %v509
    %v512 = vlaneseq
    %v513 = vshrl.u32 %v512, 7
    %v514 = vsub.s32 0, %v513
    %v515 = vrot.slane %v164, %v514
    %v517 = vadd.f32 %v494, %v515
    %v518 = vmul.f32 %v503, %v517
    %v519 = vadd.f32 %v337, %v518
    %v520 = vtanh.pop %v519
    %v521 = vsub.f32 1.0, %v510
    %v522 = vmul.f32 %v521, %v520
    %v523 = vmul.f32 %v510, %v355
    %v524 = vadd.f32 %v522, %v523
    %525 = vst [vmem:[#allocation2] sm:$0xff] %v524
    %526 = vmatprep.subr.mxu0 %v116
    %527 = vmatpush1.msra.mxu0 %v115
    %528 = vmatprep.subr.mxu0 %v119
    %529 = vmatpush1.msra.mxu0 %v118
    %530 = vmatprep.subr.mxu0 %v122
    %531 = vmatpush1.msra.mxu0 %v121
    %532 = vmatprep.subr.mxu0 %v125
    %533 = vmatpush1.msra.mxu0 %v124
    %534 = vmatprep.subr.mxu0 %v128
    %535 = vmatpush1.msra.mxu0 %v127
    %536 = vmatprep.subr.mxu0 %v131
    %537 = vmatpush1.msra.mxu0 %v130
    %538 = vmatprep.subr.mxu0 %v134
    %539 = vmatpush1.msra.mxu0 %v133
    %540 = vmatprep.subr.mxu0 %v137
    %541 = vmatpush1.msra.mxu0 %v136
    %542 = vmatprep.subr.mxu0 %v140
    %543 = vmatpush1.msra.mxu0 %v139
    %544 = vmatprep.subr.mxu0 %v143
    %545 = vmatpush1.msra.mxu0 %v142
    %546 = vmatprep.subr.mxu0 %v146
    %547 = vmatpush1.msra.mxu0 %v145
    %548 = vmatprep.subr.mxu0 %v149
    %549 = vmatpush1.msra.mxu0 %v148
    %550 = vmatprep.subr.mxu0 %v152
    %551 = vmatpush1.msra.mxu0 %v151
    %552 = vmatprep.subr.mxu0 %v155
    %553 = vmatpush1.msra.mxu0 %v154
    %554 = vmatprep.subr.mxu0 %v158
    %555 = vmatpush1.msra.mxu0 %v157
    %556 = vmatprep.subr.mxu0 %v161
    %557 = vmatpush1.msra.mxu0 %v160
    %558 = vmatprep.subr.mxu0 0.0
    %559 = vmatpush1.msra.mxu0 0.0
    %560 = vmatprep.subr.mxu0 0.0
    %561 = vmatpush1.msra.mxu0 0.0
    %562 = vmatprep.subr.mxu0 0.0
    %563 = vmatpush1.msra.mxu0 0.0
    %564 = vmatprep.subr.mxu0 0.0
    %565 = vmatpush1.msra.mxu0 0.0
    %566 = vmatprep.subr.mxu0 0.0
    %567 = vmatpush1.msra.mxu0 0.0
    %568 = vmatprep.subr.mxu0 0.0
    %569 = vmatpush1.msra.mxu0 0.0
    %570 = vmatprep.subr.mxu0 0.0
    %571 = vmatpush1.msra.mxu0 0.0
    %572 = vmatprep.subr.mxu0 0.0
    %573 = vmatpush1.msra.mxu0 0.0
    %574 = vmatprep.subr.mxu0 0.0
    %575 = vmatpush1.msra.mxu0 0.0
    %576 = vmatprep.subr.mxu0 0.0
    %577 = vmatpush1.msra.mxu0 0.0
    %578 = vmatprep.subr.mxu0 0.0
    %579 = vmatpush1.msra.mxu0 0.0
    %580 = vmatprep.subr.mxu0 0.0
    %581 = vmatpush1.msra.mxu0 0.0
    %582 = vmatprep.subr.mxu0 0.0
    %583 = vmatpush1.msra.mxu0 0.0
    %584 = vmatprep.subr.mxu0 0.0
    %585 = vmatpush1.msra.mxu0 0.0
    %586 = vmatprep.subr.mxu0 0.0
    %587 = vmatpush1.msra.mxu0 0.0
    %588 = vmatprep.subr.mxu0 0.0
    %589 = vmatpush1.msra.mxu0 0.0
    %590 = vmatprep.mubr.f32.mxu0 0.0
    %591 = vmatmul.mubr.f32.gmra.mrb[0].mxu0 %v524
    %v592 = vpop.f32.mrb[0].mxu0
    %v593 = vadd.f32 0.0, %v592
    %v594 = vpop.f32.mrb[0].mxu0
    %v595 = vadd.f32 0.0, %v594
    %596 = vdwg.mxu0
    %597 = vmatprep.subr.mxu0 0.0
    %598 = vmatpush1.msra.mxu0 %v117
    %599 = vmatprep.subr.mxu0 0.0
    %600 = vmatpush1.msra.mxu0 %v120
    %601 = vmatprep.subr.mxu0 0.0
    %602 = vmatpush1.msra.mxu0 %v123
    %603 = vmatprep.subr.mxu0 0.0
    %604 = vmatpush1.msra.mxu0 %v126
    %605 = vmatprep.subr.mxu0 0.0
    %606 = vmatpush1.msra.mxu0 %v129
    %607 = vmatprep.subr.mxu0 0.0
    %608 = vmatpush1.msra.mxu0 %v132
    %609 = vmatprep.subr.mxu0 0.0
    %610 = vmatpush1.msra.mxu0 %v135
    %611 = vmatprep.subr.mxu0 0.0
    %612 = vmatpush1.msra.mxu0 %v138
    %613 = vmatprep.subr.mxu0 0.0
    %614 = vmatpush1.msra.mxu0 %v141
    %615 = vmatprep.subr.mxu0 0.0
    %616 = vmatpush1.msra.mxu0 %v144
    %617 = vmatprep.subr.mxu0 0.0
    %618 = vmatpush1.msra.mxu0 %v147
    %619 = vmatprep.subr.mxu0 0.0
    %620 = vmatpush1.msra.mxu0 %v150
    %621 = vmatprep.subr.mxu0 0.0
    %622 = vmatpush1.msra.mxu0 %v153
    %623 = vmatprep.subr.mxu0 0.0
    %624 = vmatpush1.msra.mxu0 %v156
    %625 = vmatprep.subr.mxu0 0.0
    %626 = vmatpush1.msra.mxu0 %v159
    %627 = vmatprep.subr.mxu0 0.0
    %628 = vmatpush1.msra.mxu0 %v162
    %629 = vmatprep.subr.mxu0 0.0
    %630 = vmatpush1.msra.mxu0 0.0
    %631 = vmatprep.subr.mxu0 0.0
    %632 = vmatpush1.msra.mxu0 0.0
    %633 = vmatprep.subr.mxu0 0.0
    %634 = vmatpush1.msra.mxu0 0.0
    %635 = vmatprep.subr.mxu0 0.0
    %636 = vmatpush1.msra.mxu0 0.0
    %637 = vmatprep.subr.mxu0 0.0
    %638 = vmatpush1.msra.mxu0 0.0
    %639 = vmatprep.subr.mxu0 0.0
    %640 = vmatpush1.msra.mxu0 0.0
    %641 = vmatprep.subr.mxu0 0.0
    %642 = vmatpush1.msra.mxu0 0.0
    %643 = vmatprep.subr.mxu0 0.0
    %644 = vmatpush1.msra.mxu0 0.0
    %645 = vmatprep.subr.mxu0 0.0
    %646 = vmatpush1.msra.mxu0 0.0
    %647 = vmatprep.subr.mxu0 0.0
    %648 = vmatpush1.msra.mxu0 0.0
    %649 = vmatprep.subr.mxu0 0.0
    %650 = vmatpush1.msra.mxu0 0.0
    %651 = vmatprep.subr.mxu0 0.0
    %652 = vmatpush1.msra.mxu0 0.0
    %653 = vmatprep.subr.mxu0 0.0
    %654 = vmatpush1.msra.mxu0 0.0
    %655 = vmatprep.subr.mxu0 0.0
    %656 = vmatpush1.msra.mxu0 0.0
    %657 = vmatprep.subr.mxu0 0.0
    %658 = vmatpush1.msra.mxu0 0.0
    %659 = vmatprep.subr.mxu0 0.0
    %660 = vmatpush1.msra.mxu0 0.0
    %661 = vmatprep.mubr.f32.mxu0 0.0
    %662 = vmatmul.mubr.f32.gmra.mrb[0].mxu0 %v524
    %v663 = vpop.f32.mrb[0].mxu0
    %v664 = vadd.f32 0.0, %v663
    %v665 = vpop.f32.mrb[0].mxu0
    %666 = vdwg.mxu0
    %v667 = vadd.f32 %v254, %v593
    %v668 = vxor.u32 %v667, 2147483648
    %v669 = vmul.f32 %v668, 1.442695
    %v670 = vpow.pop %v669
    %v671 = vadd.f32 %v670, 1.0
    %v672 = vrcp.pop %v671
    %v673 = vmul.f32 1.0, %v672
    %v674 = vadd.f32 %v256, %v595
    %v675 = vxor.u32 %v674, 2147483648
    %v676 = vmul.f32 %v675, 1.442695
    %v677 = vpow.pop %v676
    %v678 = vadd.f32 %v677, 1.0
    %v679 = vrcp.pop %v678
    %v680 = vmul.f32 1.0, %v679
    %v681 = vadd.f32 %v664, %v515
    %v682 = vmul.f32 %v673, %v681
    %v683 = vadd.f32 %v342, %v682
    %v684 = vtanh.pop %v683
    %v685 = vsub.f32 1.0, %v680
    %v686 = vmul.f32 %v685, %v684
    %v687 = vmul.f32 %v680, %v524
    %v688 = vadd.f32 %v686, %v687
    %689 = vst [vmem:[#allocation2 + $0x8] sm:$0xff] %v688
    %690 = vmatprep.subr.mxu0 %v116
    %691 = vmatpush1.msra.mxu0 %v115
    %692 = vmatprep.subr.mxu0 %v119
    %693 = vmatpush1.msra.mxu0 %v118
    %694 = vmatprep.subr.mxu0 %v122
    %695 = vmatpush1.msra.mxu0 %v121
    %696 = vmatprep.subr.mxu0 %v125
    %697 = vmatpush1.msra.mxu0 %v124
    %698 = vmatprep.subr.mxu0 %v128
    %699 = vmatpush1.msra.mxu0 %v127
    %700 = vmatprep.subr.mxu0 %v131
    %701 = vmatpush1.msra.mxu0 %v130
    %702 = vmatprep.subr.mxu0 %v134
    %703 = vmatpush1.msra.mxu0 %v133
    %704 = vmatprep.subr.mxu0 %v137
    %705 = vmatpush1.msra.mxu0 %v136
    %706 = vmatprep.subr.mxu0 %v140
    %707 = vmatpush1.msra.mxu0 %v139
    %708 = vmatprep.subr.mxu0 %v143
    %709 = vmatpush1.msra.mxu0 %v142
    %710 = vmatprep.subr.mxu0 %v146
    %711 = vmatpush1.msra.mxu0 %v145
    %712 = vmatprep.subr.mxu0 %v149
    %713 = vmatpush1.msra.mxu0 %v148
    %714 = vmatprep.subr.mxu0 %v152
    %715 = vmatpush1.msra.mxu0 %v151
    %716 = vmatprep.subr.mxu0 %v155
    %717 = vmatpush1.msra.mxu0 %v154
    %718 = vmatprep.subr.mxu0 %v158
    %719 = vmatpush1.msra.mxu0 %v157
    %720 = vmatprep.subr.mxu0 %v161
    %721 = vmatpush1.msra.mxu0 %v160
    %722 = vmatprep.subr.mxu0 0.0
    %723 = vmatpush1.msra.mxu0 0.0
    %724 = vmatprep.subr.mxu0 0.0
    %725 = vmatpush1.msra.mxu0 0.0
    %726 = vmatprep.subr.mxu0 0.0
    %727 = vmatpush1.msra.mxu0 0.0
    %728 = vmatprep.subr.mxu0 0.0
    %729 = vmatpush1.msra.mxu0 0.0
    %730 = vmatprep.subr.mxu0 0.0
    %731 = vmatpush1.msra.mxu0 0.0
    %732 = vmatprep.subr.mxu0 0.0
    %733 = vmatpush1.msra.mxu0 0.0
    %734 = vmatprep.subr.mxu0 0.0
    %735 = vmatpush1.msra.mxu0 0.0
    %736 = vmatprep.subr.mxu0 0.0
    %737 = vmatpush1.msra.mxu0 0.0
    %738 = vmatprep.subr.mxu0 0.0
    %739 = vmatpush1.msra.mxu0 0.0
    %740 = vmatprep.subr.mxu0 0.0
    %741 = vmatpush1.msra.mxu0 0.0
    %742 = vmatprep.subr.mxu0 0.0
    %743 = vmatpush1.msra.mxu0 0.0
    %744 = vmatprep.subr.mxu0 0.0
    %745 = vmatpush1.msra.mxu0 0.0
    %746 = vmatprep.subr.mxu0 0.0
    %747 = vmatpush1.msra.mxu0 0.0
    %748 = vmatprep.subr.mxu0 0.0
    %749 = vmatpush1.msra.mxu0 0.0
    %750 = vmatprep.subr.mxu0 0.0
    %751 = vmatpush1.msra.mxu0 0.0
    %752 = vmatprep.subr.mxu0 0.0
    %753 = vmatpush1.msra.mxu0 0.0
    %754 = vmatprep.mubr.f32.mxu0 0.0
    %755 = vmatmul.mubr.f32.gmra.mrb[0].mxu0 %v688
    %v756 = vpop.f32.mrb[0].mxu0
    %v757 = vadd.f32 0.0, %v756
    %v758 = vpop.f32.mrb[0].mxu0
    %v759 = vadd.f32 0.0, %v758
    %760 = vdwg.mxu0
    %761 = vmatprep.subr.mxu0 0.0
    %762 = vmatpush1.msra.mxu0 %v117
    %763 = vmatprep.subr.mxu0 0.0
    %764 = vmatpush1.msra.mxu0 %v120
    %765 = vmatprep.subr.mxu0 0.0
    %766 = vmatpush1.msra.mxu0 %v123
    %767 = vmatprep.subr.mxu0 0.0
    %768 = vmatpush1.msra.mxu0 %v126
    %769 = vmatprep.subr.mxu0 0.0
    %770 = vmatpush1.msra.mxu0 %v129
    %771 = vmatprep.subr.mxu0 0.0
    %772 = vmatpush1.msra.mxu0 %v132
    %773 = vmatprep.subr.mxu0 0.0
    %774 = vmatpush1.msra.mxu0 %v135
    %775 = vmatprep.subr.mxu0 0.0
    %776 = vmatpush1.msra.mxu0 %v138
    %777 = vmatprep.subr.mxu0 0.0
    %778 = vmatpush1.msra.mxu0 %v141
    %779 = vmatprep.subr.mxu0 0.0
    %780 = vmatpush1.msra.mxu0 %v144
    %781 = vmatprep.subr.mxu0 0.0
    %782 = vmatpush1.msra.mxu0 %v147
    %783 = vmatprep.subr.mxu0 0.0
    %784 = vmatpush1.msra.mxu0 %v150
    %785 = vmatprep.subr.mxu0 0.0
    %786 = vmatpush1.msra.mxu0 %v153
    %787 = vmatprep.subr.mxu0 0.0
    %788 = vmatpush1.msra.mxu0 %v156
    %789 = vmatprep.subr.mxu0 0.0
    %790 = vmatpush1.msra.mxu0 %v159
    %791 = vmatprep.subr.mxu0 0.0
    %792 = vmatpush1.msra.mxu0 %v162
    %793 = vmatprep.subr.mxu0 0.0
    %794 = vmatpush1.msra.mxu0 0.0
    %795 = vmatprep.subr.mxu0 0.0
    %796 = vmatpush1.msra.mxu0 0.0
    %797 = vmatprep.subr.mxu0 0.0
    %798 = vmatpush1.msra.mxu0 0.0
    %799 = vmatprep.subr.mxu0 0.0
    %800 = vmatpush1.msra.mxu0 0.0
    %801 = vmatprep.subr.mxu0 0.0
    %802 = vmatpush1.msra.mxu0 0.0
    %803 = vmatprep.subr.mxu0 0.0
    %804 = vmatpush1.msra.mxu0 0.0
    %805 = vmatprep.subr.mxu0 0.0
    %806 = vmatpush1.msra.mxu0 0.0
    %807 = vmatprep.subr.mxu0 0.0
    %808 = vmatpush1.msra.mxu0 0.0
    %809 = vmatprep.subr.mxu0 0.0
    %810 = vmatpush1.msra.mxu0 0.0
    %811 = vmatprep.subr.mxu0 0.0
    %812 = vmatpush1.msra.mxu0 0.0
    %813 = vmatprep.subr.mxu0 0.0
    %814 = vmatpush1.msra.mxu0 0.0
    %815 = vmatprep.subr.mxu0 0.0
    %816 = vmatpush1.msra.mxu0 0.0
    %817 = vmatprep.subr.mxu0 0.0
    %818 = vmatpush1.msra.mxu0 0.0
    %819 = vmatprep.subr.mxu0 0.0
    %820 = vmatpush1.msra.mxu0 0.0
    %821 = vmatprep.subr.mxu0 0.0
    %822 = vmatpush1.msra.mxu0 0.0
    %823 = vmatprep.subr.mxu0 0.0
    %824 = vmatpush1.msra.mxu0 0.0
    %825 = vmatprep.mubr.f32.mxu0 0.0
    %826 = vmatmul.mubr.f32.gmra.mrb[0].mxu0 %v688
    %v827 = vpop.f32.mrb[0].mxu0
    %v828 = vadd.f32 0.0, %v827
    %v829 = vpop.f32.mrb[0].mxu0
    %830 = vdwg.mxu0
    %v831 = vadd.f32 %v260, %v757
    %v832 = vxor.u32 %v831, 2147483648
    %v833 = vmul.f32 %v832, 1.442695
    %v834 = vpow.pop %v833
    %v835 = vadd.f32 %v834, 1.0
    %v836 = vrcp.pop %v835
    %v837 = vmul.f32 1.0, %v836
    %v838 = vadd.f32 %v262, %v759
    %v839 = vxor.u32 %v838, 2147483648
    %v840 = vmul.f32 %v839, 1.442695
    %v841 = vpow.pop %v840
    %v842 = vadd.f32 %v841, 1.0
    %v843 = vrcp.pop %v842
    %v844 = vmul.f32 1.0, %v843
    %v845 = vadd.f32 %v828, %v515
    %v846 = vmul.f32 %v837, %v845
    %v847 = vadd.f32 %v347, %v846
    %v848 = vtanh.pop %v847
    %v849 = vsub.f32 1.0, %v844
    %v850 = vmul.f32 %v849, %v848
    %v851 = vmul.f32 %v844, %v688
    %v852 = vadd.f32 %v850, %v851
    %853 = vst [vmem:[#allocation2 + $0x10] sm:$0xff] %v852
    %854 = vmatprep.subr.mxu0 %v116
    %855 = vmatpush1.msra.mxu0 %v115
    %856 = vmatprep.subr.mxu0 %v119
    %857 = vmatpush1.msra.mxu0 %v118
    %858 = vmatprep.subr.mxu0 %v122
    %859 = vmatpush1.msra.mxu0 %v121
    %860 = vmatprep.subr.mxu0 %v125
    %861 = vmatpush1.msra.mxu0 %v124
    %862 = vmatprep.subr.mxu0 %v128
    %863 = vmatpush1.msra.mxu0 %v127
    %864 = vmatprep.subr.mxu0 %v131
    %865 = vmatpush1.msra.mxu0 %v130
    %866 = vmatprep.subr.mxu0 %v134
    %867 = vmatpush1.msra.mxu0 %v133
    %868 = vmatprep.subr.mxu0 %v137
    %869 = vmatpush1.msra.mxu0 %v136
    %870 = vmatprep.subr.mxu0 %v140
    %871 = vmatpush1.msra.mxu0 %v139
    %872 = vmatprep.subr.mxu0 %v143
    %873 = vmatpush1.msra.mxu0 %v142
    %874 = vmatprep.subr.mxu0 %v146
    %875 = vmatpush1.msra.mxu0 %v145
    %876 = vmatprep.subr.mxu0 %v149
    %877 = vmatpush1.msra.mxu0 %v148
    %878 = vmatprep.subr.mxu0 %v152
    %879 = vmatpush1.msra.mxu0 %v151
    %880 = vmatprep.subr.mxu0 %v155
    %881 = vmatpush1.msra.mxu0 %v154
    %882 = vmatprep.subr.mxu0 %v158
    %883 = vmatpush1.msra.mxu0 %v157
    %884 = vmatprep.subr.mxu0 %v161
    %885 = vmatpush1.msra.mxu0 %v160
    %886 = vmatprep.subr.mxu0 0.0
    %887 = vmatpush1.msra.mxu0 0.0
    %888 = vmatprep.subr.mxu0 0.0
    %889 = vmatpush1.msra.mxu0 0.0
    %890 = vmatprep.subr.mxu0 0.0
    %891 = vmatpush1.msra.mxu0 0.0
    %892 = vmatprep.subr.mxu0 0.0
    %893 = vmatpush1.msra.mxu0 0.0
    %894 = vmatprep.subr.mxu0 0.0
    %895 = vmatpush1.msra.mxu0 0.0
    %896 = vmatprep.subr.mxu0 0.0
    %897 = vmatpush1.msra.mxu0 0.0
    %898 = vmatprep.subr.mxu0 0.0
    %899 = vmatpush1.msra.mxu0 0.0
    %900 = vmatprep.subr.mxu0 0.0
    %901 = vmatpush1.msra.mxu0 0.0
    %902 = vmatprep.subr.mxu0 0.0
    %903 = vmatpush1.msra.mxu0 0.0
    %904 = vmatprep.subr.mxu0 0.0
    %905 = vmatpush1.msra.mxu0 0.0
    %906 = vmatprep.subr.mxu0 0.0
    %907 = vmatpush1.msra.mxu0 0.0
    %908 = vmatprep.subr.mxu0 0.0
    %909 = vmatpush1.msra.mxu0 0.0
    %910 = vmatprep.subr.mxu0 0.0
    %911 = vmatpush1.msra.mxu0 0.0
    %912 = vmatprep.subr.mxu0 0.0
    %913 = vmatpush1.msra.mxu0 0.0
    %914 = vmatprep.subr.mxu0 0.0
    %915 = vmatpush1.msra.mxu0 0.0
    %916 = vmatprep.subr.mxu0 0.0
    %917 = vmatpush1.msra.mxu0 0.0
    %918 = vmatprep.mubr.f32.mxu0 0.0
    %919 = vmatmul.mubr.f32.gmra.mrb[0].mxu0 %v852
    %v920 = vpop.f32.mrb[0].mxu0
    %v921 = vadd.f32 0.0, %v920
    %v922 = vpop.f32.mrb[0].mxu0
    %v923 = vadd.f32 0.0, %v922
    %924 = vdwg.mxu0
    %925 = vmatprep.subr.mxu0 0.0
    %926 = vmatpush1.msra.mxu0 %v117
    %927 = vmatprep.subr.mxu0 0.0
    %928 = vmatpush1.msra.mxu0 %v120
    %929 = vmatprep.subr.mxu0 0.0
    %930 = vmatpush1.msra.mxu0 %v123
    %931 = vmatprep.subr.mxu0 0.0
    %932 = vmatpush1.msra.mxu0 %v126
    %933 = vmatprep.subr.mxu0 0.0
    %934 = vmatpush1.msra.mxu0 %v129
    %935 = vmatprep.subr.mxu0 0.0
    %936 = vmatpush1.msra.mxu0 %v132
    %937 = vmatprep.subr.mxu0 0.0
    %938 = vmatpush1.msra.mxu0 %v135
    %939 = vmatprep.subr.mxu0 0.0
    %940 = vmatpush1.msra.mxu0 %v138
    %941 = vmatprep.subr.mxu0 0.0
    %942 = vmatpush1.msra.mxu0 %v141
    %943 = vmatprep.subr.mxu0 0.0
    %944 = vmatpush1.msra.mxu0 %v144
    %945 = vmatprep.subr.mxu0 0.0
    %946 = vmatpush1.msra.mxu0 %v147
    %947 = vmatprep.subr.mxu0 0.0
    %948 = vmatpush1.msra.mxu0 %v150
    %949 = vmatprep.subr.mxu0 0.0
    %950 = vmatpush1.msra.mxu0 %v153
    %951 = vmatprep.subr.mxu0 0.0
    %952 = vmatpush1.msra.mxu0 %v156
    %953 = vmatprep.subr.mxu0 0.0
    %954 = vmatpush1.msra.mxu0 %v159
    %955 = vmatprep.subr.mxu0 0.0
    %956 = vmatpush1.msra.mxu0 %v162
    %957 = vmatprep.subr.mxu0 0.0
    %958 = vmatpush1.msra.mxu0 0.0
    %959 = vmatprep.subr.mxu0 0.0
    %960 = vmatpush1.msra.mxu0 0.0
    %961 = vmatprep.subr.mxu0 0.0
    %962 = vmatpush1.msra.mxu0 0.0
    %963 = vmatprep.subr.mxu0 0.0
    %964 = vmatpush1.msra.mxu0 0.0
    %965 = vmatprep.subr.mxu0 0.0
    %966 = vmatpush1.msra.mxu0 0.0
    %967 = vmatprep.subr.mxu0 0.0
    %968 = vmatpush1.msra.mxu0 0.0
    %969 = vmatprep.subr.mxu0 0.0
    %970 = vmatpush1.msra.mxu0 0.0
    %971 = vmatprep.subr.mxu0 0.0
    %972 = vmatpush1.msra.mxu0 0.0
    %973 = vmatprep.subr.mxu0 0.0
    %974 = vmatpush1.msra.mxu0 0.0
    %975 = vmatprep.subr.mxu0 0.0
    %976 = vmatpush1.msra.mxu0 0.0
    %977 = vmatprep.subr.mxu0 0.0
    %978 = vmatpush1.msra.mxu0 0.0
    %979 = vmatprep.subr.mxu0 0.0
    %980 = vmatpush1.msra.mxu0 0.0
    %981 = vmatprep.subr.mxu0 0.0
    %982 = vmatpush1.msra.mxu0 0.0
    %983 = vmatprep.subr.mxu0 0.0
    %984 = vmatpush1.msra.mxu0 0.0
    %985 = vmatprep.subr.mxu0 0.0
    %986 = vmatpush1.msra.mxu0 0.0
    %987 = vmatprep.subr.mxu0 0.0
    %988 = vmatpush1.msra.mxu0 0.0
    %989 = vmatprep.mubr.f32.mxu0 0.0
    %990 = vmatmul.mubr.f32.gmra.mrb[0].mxu0 %v852
    %v991 = vpop.f32.mrb[0].mxu0
    %v992 = vadd.f32 0.0, %v991
    %v993 = vpop.f32.mrb[0].mxu0
    %994 = vdwg.mxu0
    %v995 = vadd.f32 %v266, %v921
    %v996 = vxor.u32 %v995, 2147483648
    %v997 = vmul.f32 %v996, 1.442695
    %v998 = vpow.pop %v997
    %v999 = vadd.f32 %v998, 1.0
    %v1000 = vrcp.pop %v999
    %v1001 = vmul.f32 1.0, %v1000
    %v1002 = vadd.f32 %v268, %v923
    %v1003 = vxor.u32 %v1002, 2147483648
    %v1004 = vmul.f32 %v1003, 1.442695
    %v1005 = vpow.pop %v1004
    %v1006 = vadd.f32 %v1005, 1.0
    %v1007 = vrcp.pop %v1006
    %v1008 = vmul.f32 1.0, %v1007
    %v1009 = vadd.f32 %v992, %v515
    %v1010 = vmul.f32 %v1001, %v1009
    %v1011 = vadd.f32 %v352, %v1010
    %v1012 = vtanh.pop %v1011
    %v1013 = vsub.f32 1.0, %v1008
    %v1014 = vmul.f32 %v1013, %v1012
    %v1015 = vmul.f32 %v1008, %v852
    %v1016 = vadd.f32 %v1014, %v1015
    %1017 = vst [vmem:[#allocation2 + $0x18] sm:$0xff] %v1016
    %1018 = vst [vmem:[%s9] sm:$0xff] %v1016
    %v1019 = vld [vmem:[#allocation2] sm:$0xff]
    %v1020 = vld [vmem:[#allocation2 + $0x8] sm:$0xff]
    %v1021 = vld [vmem:[#allocation2 + $0x10] sm:$0xff]
    %v1022 = vld [vmem:[#allocation2 + $0x18] sm:$0xff]
    %s1023 = scalar_lea.vmem [#allocation3], 384
    %v1024 = vld [vmem:[%s1023] sm:$0xff]
    %v1025 = vld [vmem:[%s1023 + $0x8] sm:$0xff]
    %v1026 = vld [vmem:[%s1023 + $0x10] sm:$0xff]
    %v1027 = vld [vmem:[%s1023 + $0x18] sm:$0xff]
    %v1028 = vld [vmem:[%s1023 + $0x20] sm:$0xff]
    %v1029 = vld [vmem:[%s1023 + $0x28] sm:$0xff]
    %v1030 = vld [vmem:[%s1023 + $0x30] sm:$0xff]
    %v1031 = vld [vmem:[%s1023 + $0x38] sm:$0xff]
    %v1032 = vld [vmem:[%s1023 + $0x40] sm:$0xff]
    %v1033 = vld [vmem:[%s1023 + $0x48] sm:$0xff]
    %v1034 = vld [vmem:[%s1023 + $0x50] sm:$0xff]
    %v1035 = vld [vmem:[%s1023 + $0x58] sm:$0xff]
    %v1036 = vld [vmem:[%s1023 + $0x60] sm:$0xff]
    %v1037 = vld [vmem:[%s1023 + $0x68] sm:$0xff]
    %v1038 = vld [vmem:[%s1023 + $0x70] sm:$0xff]
    %v1039 = vld [vmem:[%s1023 + $0x78] sm:$0xff]
    %v1040 = vld [vmem:[%s1023 + $0x80] sm:$0xff]
    %v1041 = vld [vmem:[%s1023 + $0x88] sm:$0xff]
    %v1042 = vld [vmem:[%s1023 + $0x90] sm:$0xff]
    %v1043 = vld [vmem:[%s1023 + $0x98] sm:$0xff]
    %v1044 = vld [vmem:[%s1023 + $0xa0] sm:$0xff]
    %v1045 = vld [vmem:[%s1023 + $0xa8] sm:$0xff]
    %v1046 = vld [vmem:[%s1023 + $0xb0] sm:$0xff]
    %v1047 = vld [vmem:[%s1023 + $0xb8] sm:$0xff]
    %v1048 = vld [vmem:[%s1023 + $0xc0] sm:$0xff]
    %v1049 = vld [vmem:[%s1023 + $0xc8] sm:$0xff]
    %v1050 = vld [vmem:[%s1023 + $0xd0] sm:$0xff]
    %v1051 = vld [vmem:[%s1023 + $0xd8] sm:$0xff]
    %v1052 = vld [vmem:[%s1023 + $0xe0] sm:$0xff]
    %v1053 = vld [vmem:[%s1023 + $0xe8] sm:$0xff]
    %v1054 = vld [vmem:[%s1023 + $0xf0] sm:$0xff]
    %v1055 = vld [vmem:[%s1023 + $0xf8] sm:$0xff]
    %v1056 = vld [vmem:[%s1023 + $0x100] sm:$0xff]
    %v1057 = vld [vmem:[%s1023 + $0x108] sm:$0xff]
    %v1058 = vld [vmem:[%s1023 + $0x110] sm:$0xff]
    %v1059 = vld [vmem:[%s1023 + $0x118] sm:$0xff]
    %v1060 = vld [vmem:[%s1023 + $0x120] sm:$0xff]
    %v1061 = vld [vmem:[%s1023 + $0x128] sm:$0xff]
    %v1062 = vld [vmem:[%s1023 + $0x130] sm:$0xff]
    %v1063 = vld [vmem:[%s1023 + $0x138] sm:$0xff]
    %v1064 = vld [vmem:[%s1023 + $0x140] sm:$0xff]
    %v1065 = vld [vmem:[%s1023 + $0x148] sm:$0xff]
    %v1066 = vld [vmem:[%s1023 + $0x150] sm:$0xff]
    %v1067 = vld [vmem:[%s1023 + $0x158] sm:$0xff]
    %v1068 = vld [vmem:[%s1023 + $0x160] sm:$0xff]
    %v1069 = vld [vmem:[%s1023 + $0x168] sm:$0xff]
    %v1070 = vld [vmem:[%s1023 + $0x170] sm:$0xff]
    %v1071 = vld [vmem:[%s1023 + $0x178] sm:$0xff]
    %s1072 = scalar_lea.vmem [#allocation5], 384
    %v1073 = vld [vmem:[%s1072] sm:$0xff]
    %v1074 = vld [vmem:[%s1072 + $0x8] sm:$0xff]
    %v1075 = vld [vmem:[%s1072 + $0x10] sm:$0xff]
    %v1076 = vld [vmem:[%s1072 + $0x18] sm:$0xff]
    %v1077 = vld [vmem:[%s1072 + $0x20] sm:$0xff]
    %v1078 = vld [vmem:[%s1072 + $0x28] sm:$0xff]
    %v1079 = vld [vmem:[%s1072 + $0x30] sm:$0xff]
    %v1080 = vld [vmem:[%s1072 + $0x38] sm:$0xff]
    %v1081 = vld [vmem:[%s1072 + $0x40] sm:$0xff]
    %v1082 = vld [vmem:[%s1072 + $0x48] sm:$0xff]
    %v1083 = vld [vmem:[%s1072 + $0x50] sm:$0xff]
    %v1084 = vld [vmem:[%s1072 + $0x58] sm:$0xff]
    %v1085 = vld [vmem:[%s1072 + $0x60] sm:$0xff]
    %v1086 = vld [vmem:[%s1072 + $0x68] sm:$0xff]
    %v1087 = vld [vmem:[%s1072 + $0x70] sm:$0xff]
    %v1088 = vld [vmem:[%s1072 + $0x78] sm:$0xff]
    %v1089 = vld [vmem:[%s1072 + $0x80] sm:$0xff]
    %v1090 = vld [vmem:[%s1072 + $0x88] sm:$0xff]
    %v1091 = vld [vmem:[%s1072 + $0x90] sm:$0xff]
    %v1092 = vld [vmem:[%s1072 + $0x98] sm:$0xff]
    %v1093 = vld [vmem:[%s1072 + $0xa0] sm:$0xff]
    %v1094 = vld [vmem:[%s1072 + $0xa8] sm:$0xff]
    %v1095 = vld [vmem:[%s1072 + $0xb0] sm:$0xff]
    %v1096 = vld [vmem:[%s1072 + $0xb8] sm:$0xff]
    %v1097 = vld [vmem:[%s1072 + $0xc0] sm:$0xff]
    %v1098 = vld [vmem:[%s1072 + $0xc8] sm:$0xff]
    %v1099 = vld [vmem:[%s1072 + $0xd0] sm:$0xff]
    %v1100 = vld [vmem:[%s1072 + $0xd8] sm:$0xff]
    %v1101 = vld [vmem:[%s1072 + $0xe0] sm:$0xff]
    %v1102 = vld [vmem:[%s1072 + $0xe8] sm:$0xff]
    %v1103 = vld [vmem:[%s1072 + $0xf0] sm:$0xff]
    %v1104 = vld [vmem:[%s1072 + $0xf8] sm:$0xff]
    %v1105 = vld [vmem:[%s1072 + $0x100] sm:$0xff]
    %v1106 = vld [vmem:[%s1072 + $0x108] sm:$0xff]
    %v1107 = vld [vmem:[%s1072 + $0x110] sm:$0xff]
    %v1108 = vld [vmem:[%s1072 + $0x118] sm:$0xff]
    %v1109 = vld [vmem:[%s1072 + $0x120] sm:$0xff]
    %v1110 = vld [vmem:[%s1072 + $0x128] sm:$0xff]
    %v1111 = vld [vmem:[%s1072 + $0x130] sm:$0xff]
    %v1112 = vld [vmem:[%s1072 + $0x138] sm:$0xff]
    %v1113 = vld [vmem:[%s1072 + $0x140] sm:$0xff]
    %v1114 = vld [vmem:[%s1072 + $0x148] sm:$0xff]
    %v1115 = vld [vmem:[%s1072 + $0x150] sm:$0xff]
    %v1116 = vld [vmem:[%s1072 + $0x158] sm:$0xff]
    %v1117 = vld [vmem:[%s1072 + $0x160] sm:$0xff]
    %v1118 = vld [vmem:[%s1072 + $0x168] sm:$0xff]
    %v1119 = vld [vmem:[%s1072 + $0x170] sm:$0xff]
    %v1120 = vld [vmem:[%s1072 + $0x178] sm:$0xff]
    %s1121 = scalar_lea.vmem %s4, 3
    %v1122 = vld [vmem:[%s1121] sm:$0x7]
    %s1123 = scalar_lea.vmem %s5, 1
    %v1124 = vld [vmem:[%s1123] sm:$0x1]
    %v1126 = vlaneseq
    %v1127 = vshrl.u32 %v1126, 7
    %v1128 = vsub.s32 0, %v1127
    %v1129 = vrot.slane %v1122, %v1128
    %v1130 = vlaneseq
    %v1131 = vshrl.u32 %v1130, 7
    %v1132 = vsub.s32 1, %v1131
    %v1133 = vrot.slane %v1122, %v1132
    %v1134 = vlaneseq
    %v1135 = vshrl.u32 %v1134, 7
    %v1136 = vsub.s32 2, %v1135
    %v1137 = vrot.slane %v1122, %v1136
    %1141 = vmatprep.subr.mxu0 %v1025
    %1142 = vmatpush1.msra.mxu0 %v1024
    %1143 = vmatprep.subr.mxu0 %v1028
    %1144 = vmatpush1.msra.mxu0 %v1027
    %1145 = vmatprep.subr.mxu0 %v1031
    %1146 = vmatpush1.msra.mxu0 %v1030
    %1147 = vmatprep.subr.mxu0 %v1034
    %1148 = vmatpush1.msra.mxu0 %v1033
    %1149 = vmatprep.subr.mxu0 %v1037
    %1150 = vmatpush1.msra.mxu0 %v1036
    %1151 = vmatprep.subr.mxu0 %v1040
    %1152 = vmatpush1.msra.mxu0 %v1039
    %1153 = vmatprep.subr.mxu0 %v1043
    %1154 = vmatpush1.msra.mxu0 %v1042
    %1155 = vmatprep.subr.mxu0 %v1046
    %1156 = vmatpush1.msra.mxu0 %v1045
    %1157 = vmatprep.subr.mxu0 %v1049
    %1158 = vmatpush1.msra.mxu0 %v1048
    %1159 = vmatprep.subr.mxu0 %v1052
    %1160 = vmatpush1.msra.mxu0 %v1051
    %1161 = vmatprep.subr.mxu0 %v1055
    %1162 = vmatpush1.msra.mxu0 %v1054
    %1163 = vmatprep.subr.mxu0 %v1058
    %1164 = vmatpush1.msra.mxu0 %v1057
    %1165 = vmatprep.subr.mxu0 %v1061
    %1166 = vmatpush1.msra.mxu0 %v1060
    %1167 = vmatprep.subr.mxu0 %v1064
    %1168 = vmatpush1.msra.mxu0 %v1063
    %1169 = vmatprep.subr.mxu0 %v1067
    %1170 = vmatpush1.msra.mxu0 %v1066
    %1171 = vmatprep.subr.mxu0 %v1070
    %1172 = vmatpush1.msra.mxu0 %v1069
    %1173 = vmatprep.subr.mxu0 0.0
    %1174 = vmatpush1.msra.mxu0 0.0
    %1175 = vmatprep.subr.mxu0 0.0
    %1176 = vmatpush1.msra.mxu0 0.0
    %1177 = vmatprep.subr.mxu0 0.0
    %1178 = vmatpush1.msra.mxu0 0.0
    %1179 = vmatprep.subr.mxu0 0.0
    %1180 = vmatpush1.msra.mxu0 0.0
    %1181 = vmatprep.subr.mxu0 0.0
    %1182 = vmatpush1.msra.mxu0 0.0
    %1183 = vmatprep.subr.mxu0 0.0
    %1184 = vmatpush1.msra.mxu0 0.0
    %1185 = vmatprep.subr.mxu0 0.0
    %1186 = vmatpush1.msra.mxu0 0.0
    %1187 = vmatprep.subr.mxu0 0.0
    %1188 = vmatpush1.msra.mxu0 0.0
    %1189 = vmatprep.subr.mxu0 0.0
    %1190 = vmatpush1.msra.mxu0 0.0
    %1191 = vmatprep.subr.mxu0 0.0
    %1192 = vmatpush1.msra.mxu0 0.0
    %1193 = vmatprep.subr.mxu0 0.0
    %1194 = vmatpush1.msra.mxu0 0.0
    %1195 = vmatprep.subr.mxu0 0.0
    %1196 = vmatpush1.msra.mxu0 0.0
    %1197 = vmatprep.subr.mxu0 0.0
    %1198 = vmatpush1.msra.mxu0 0.0
    %1199 = vmatprep.subr.mxu0 0.0
    %1200 = vmatpush1.msra.mxu0 0.0
    %1201 = vmatprep.subr.mxu0 0.0
    %1202 = vmatpush1.msra.mxu0 0.0
    %1203 = vmatprep.subr.mxu0 0.0
    %1204 = vmatpush1.msra.mxu0 0.0
    %1205 = vmatprep.mubr.f32.mxu0 0.0
    %1206 = vmatmul.mubr.f32.gmra.mrb[0].mxu0 %v1019
    %v1207 = vpop.f32.mrb[0].mxu0
    %v1208 = vadd.f32 %v1129, %v1207
    %v1209 = vpop.f32.mrb[0].mxu0
    %v1210 = vadd.f32 %v1133, %v1209
    %1211 = vmatprep.mubr.f32.mxu0 0.0
    %1212 = vmatmul.mubr.f32.gmra.mrb[0].mxu0 %v1020
    %v1213 = vpop.f32.mrb[0].mxu0
    %v1214 = vadd.f32 %v1129, %v1213
    %v1215 = vpop.f32.mrb[0].mxu0
    %v1216 = vadd.f32 %v1133, %v1215
    %1217 = vmatprep.mubr.f32.mxu0 0.0
    %1218 = vmatmul.mubr.f32.gmra.mrb[0].mxu0 %v1021
    %v1219 = vpop.f32.mrb[0].mxu0
    %v1220 = vadd.f32 %v1129, %v1219
    %v1221 = vpop.f32.mrb[0].mxu0
    %v1222 = vadd.f32 %v1133, %v1221
    %1223 = vmatprep.mubr.f32.mxu0 0.0
    %1224 = vmatmul.mubr.f32.gmra.mrb[0].mxu0 %v1022
    %v1225 = vpop.f32.mrb[0].mxu0
    %v1226 = vadd.f32 %v1129, %v1225
    %v1227 = vpop.f32.mrb[0].mxu0
    %v1228 = vadd.f32 %v1133, %v1227
    %1229 = vdwg.mxu0
    %1230 = vmatprep.subr.mxu0 0.0
    %1231 = vmatpush1.msra.mxu0 %v1026
    %1232 = vmatprep.subr.mxu0 0.0
    %1233 = vmatpush1.msra.mxu0 %v1029
    %1234 = vmatprep.subr.mxu0 0.0
    %1235 = vmatpush1.msra.mxu0 %v1032
    %1236 = vmatprep.subr.mxu0 0.0
    %1237 = vmatpush1.msra.mxu0 %v1035
    %1238 = vmatprep.subr.mxu0 0.0
    %1239 = vmatpush1.msra.mxu0 %v1038
    %1240 = vmatprep.subr.mxu0 0.0
    %1241 = vmatpush1.msra.mxu0 %v1041
    %1242 = vmatprep.subr.mxu0 0.0
    %1243 = vmatpush1.msra.mxu0 %v1044
    %1244 = vmatprep.subr.mxu0 0.0
    %1245 = vmatpush1.msra.mxu0 %v1047
    %1246 = vmatprep.subr.mxu0 0.0
    %1247 = vmatpush1.msra.mxu0 %v1050
    %1248 = vmatprep.subr.mxu0 0.0
    %1249 = vmatpush1.msra.mxu0 %v1053
    %1250 = vmatprep.subr.mxu0 0.0
    %1251 = vmatpush1.msra.mxu0 %v1056
    %1252 = vmatprep.subr.mxu0 0.0
    %1253 = vmatpush1.msra.mxu0 %v1059
    %1254 = vmatprep.subr.mxu0 0.0
    %1255 = vmatpush1.msra.mxu0 %v1062
    %1256 = vmatprep.subr.mxu0 0.0
    %1257 = vmatpush1.msra.mxu0 %v1065
    %1258 = vmatprep.subr.mxu0 0.0
    %1259 = vmatpush1.msra.mxu0 %v1068
    %1260 = vmatprep.subr.mxu0 0.0
    %1261 = vmatpush1.msra.mxu0 %v1071
    %1262 = vmatprep.subr.mxu0 0.0
    %1263 = vmatpush1.msra.mxu0 0.0
    %1264 = vmatprep.subr.mxu0 0.0
    %1265 = vmatpush1.msra.mxu0 0.0
    %1266 = vmatprep.subr.mxu0 0.0
    %1267 = vmatpush1.msra.mxu0 0.0
    %1268 = vmatprep.subr.mxu0 0.0
    %1269 = vmatpush1.msra.mxu0 0.0
    %1270 = vmatprep.subr.mxu0 0.0
    %1271 = vmatpush1.msra.mxu0 0.0
    %1272 = vmatprep.subr.mxu0 0.0
    %1273 = vmatpush1.msra.mxu0 0.0
    %1274 = vmatprep.subr.mxu0 0.0
    %1275 = vmatpush1.msra.mxu0 0.0
    %1276 = vmatprep.subr.mxu0 0.0
    %1277 = vmatpush1.msra.mxu0 0.0
    %1278 = vmatprep.subr.mxu0 0.0
    %1279 = vmatpush1.msra.mxu0 0.0
    %1280 = vmatprep.subr.mxu0 0.0
    %1281 = vmatpush1.msra.mxu0 0.0
    %1282 = vmatprep.subr.mxu0 0.0
    %1283 = vmatpush1.msra.mxu0 0.0
    %1284 = vmatprep.subr.mxu0 0.0
    %1285 = vmatpush1.msra.mxu0 0.0
    %1286 = vmatprep.subr.mxu0 0.0
    %1287 = vmatpush1.msra.mxu0 0.0
    %1288 = vmatprep.subr.mxu0 0.0
    %1289 = vmatpush1.msra.mxu0 0.0
    %1290 = vmatprep.subr.mxu0 0.0
    %1291 = vmatpush1.msra.mxu0 0.0
    %1292 = vmatprep.subr.mxu0 0.0
    %1293 = vmatpush1.msra.mxu0 0.0
    %1294 = vmatprep.mubr.f32.mxu0 0.0
    %1295 = vmatmul.mubr.f32.gmra.mrb[0].mxu0 %v1019
    %v1296 = vpop.f32.mrb[0].mxu0
    %v1297 = vadd.f32 %v1137, %v1296
    %v1298 = vpop.f32.mrb[0].mxu0
    %1299 = vmatprep.mubr.f32.mxu0 0.0
    %1300 = vmatmul.mubr.f32.gmra.mrb[0].mxu0 %v1020
    %v1301 = vpop.f32.mrb[0].mxu0
    %v1302 = vadd.f32 %v1137, %v1301
    %v1303 = vpop.f32.mrb[0].mxu0
    %1304 = vmatprep.mubr.f32.mxu0 0.0
    %1305 = vmatmul.mubr.f32.gmra.mrb[0].mxu0 %v1021
    %v1306 = vpop.f32.mrb[0].mxu0
    %v1307 = vadd.f32 %v1137, %v1306
    %v1308 = vpop.f32.mrb[0].mxu0
    %1309 = vmatprep.mubr.f32.mxu0 0.0
    %1310 = vmatmul.mubr.f32.gmra.mrb[0].mxu0 %v1022
    %v1311 = vpop.f32.mrb[0].mxu0
    %v1312 = vadd.f32 %v1137, %v1311
    %v1313 = vpop.f32.mrb[0].mxu0
    %1314 = vdwg.mxu0
    %s1315 = scalar_lea.vmem %s1, 8
    %v1316 = vld [vmem:[%s1315] sm:$0xff]
    %1317 = vmatprep.subr.mxu0 %v1074
    %1318 = vmatpush1.msra.mxu0 %v1073
    %1319 = vmatprep.subr.mxu0 %v1077
    %1320 = vmatpush1.msra.mxu0 %v1076
    %1321 = vmatprep.subr.mxu0 %v1080
    %1322 = vmatpush1.msra.mxu0 %v1079
    %1323 = vmatprep.subr.mxu0 %v1083
    %1324 = vmatpush1.msra.mxu0 %v1082
    %1325 = vmatprep.subr.mxu0 %v1086
    %1326 = vmatpush1.msra.mxu0 %v1085
    %1327 = vmatprep.subr.mxu0 %v1089
    %1328 = vmatpush1.msra.mxu0 %v1088
    %1329 = vmatprep.subr.mxu0 %v1092
    %1330 = vmatpush1.msra.mxu0 %v1091
    %1331 = vmatprep.subr.mxu0 %v1095
    %1332 = vmatpush1.msra.mxu0 %v1094
    %1333 = vmatprep.subr.mxu0 %v1098
    %1334 = vmatpush1.msra.mxu0 %v1097
    %1335 = vmatprep.subr.mxu0 %v1101
    %1336 = vmatpush1.msra.mxu0 %v1100
    %1337 = vmatprep.subr.mxu0 %v1104
    %1338 = vmatpush1.msra.mxu0 %v1103
    %1339 = vmatprep.subr.mxu0 %v1107
    %1340 = vmatpush1.msra.mxu0 %v1106
    %1341 = vmatprep.subr.mxu0 %v1110
    %1342 = vmatpush1.msra.mxu0 %v1109
    %1343 = vmatprep.subr.mxu0 %v1113
    %1344 = vmatpush1.msra.mxu0 %v1112
    %1345 = vmatprep.subr.mxu0 %v1116
    %1346 = vmatpush1.msra.mxu0 %v1115
    %1347 = vmatprep.subr.mxu0 %v1119
    %1348 = vmatpush1.msra.mxu0 %v1118
    %1349 = vmatprep.subr.mxu0 0.0
    %1350 = vmatpush1.msra.mxu0 0.0
    %1351 = vmatprep.subr.mxu0 0.0
    %1352 = vmatpush1.msra.mxu0 0.0
    %1353 = vmatprep.subr.mxu0 0.0
    %1354 = vmatpush1.msra.mxu0 0.0
    %1355 = vmatprep.subr.mxu0 0.0
    %1356 = vmatpush1.msra.mxu0 0.0
    %1357 = vmatprep.subr.mxu0 0.0
    %1358 = vmatpush1.msra.mxu0 0.0
    %1359 = vmatprep.subr.mxu0 0.0
    %1360 = vmatpush1.msra.mxu0 0.0
    %1361 = vmatprep.subr.mxu0 0.0
    %1362 = vmatpush1.msra.mxu0 0.0
    %1363 = vmatprep.subr.mxu0 0.0
    %1364 = vmatpush1.msra.mxu0 0.0
    %1365 = vmatprep.subr.mxu0 0.0
    %1366 = vmatpush1.msra.mxu0 0.0
    %1367 = vmatprep.subr.mxu0 0.0
    %1368 = vmatpush1.msra.mxu0 0.0
    %1369 = vmatprep.subr.mxu0 0.0
    %1370 = vmatpush1.msra.mxu0 0.0
    %1371 = vmatprep.subr.mxu0 0.0
    %1372 = vmatpush1.msra.mxu0 0.0
    %1373 = vmatprep.subr.mxu0 0.0
    %1374 = vmatpush1.msra.mxu0 0.0
    %1375 = vmatprep.subr.mxu0 0.0
    %1376 = vmatpush1.msra.mxu0 0.0
    %1377 = vmatprep.subr.mxu0 0.0
    %1378 = vmatpush1.msra.mxu0 0.0
    %1379 = vmatprep.subr.mxu0 0.0
    %1380 = vmatpush1.msra.mxu0 0.0
    %1381 = vmatprep.mubr.f32.mxu0 0.0
    %1382 = vmatmul.mubr.f32.gmra.mrb[0].mxu0 %v1316
    %v1383 = vpop.f32.mrb[0].mxu0
    %v1384 = vadd.f32 0.0, %v1383
    %v1385 = vpop.f32.mrb[0].mxu0
    %v1386 = vadd.f32 0.0, %v1385
    %1387 = vdwg.mxu0
    %1388 = vmatprep.subr.mxu0 0.0
    %1389 = vmatpush1.msra.mxu0 %v1075
    %1390 = vmatprep.subr.mxu0 0.0
    %1391 = vmatpush1.msra.mxu0 %v1078
    %1392 = vmatprep.subr.mxu0 0.0
    %1393 = vmatpush1.msra.mxu0 %v1081
    %1394 = vmatprep.subr.mxu0 0.0
    %1395 = vmatpush1.msra.mxu0 %v1084
    %1396 = vmatprep.subr.mxu0 0.0
    %1397 = vmatpush1.msra.mxu0 %v1087
    %1398 = vmatprep.subr.mxu0 0.0
    %1399 = vmatpush1.msra.mxu0 %v1090
    %1400 = vmatprep.subr.mxu0 0.0
    %1401 = vmatpush1.msra.mxu0 %v1093
    %1402 = vmatprep.subr.mxu0 0.0
    %1403 = vmatpush1.msra.mxu0 %v1096
    %1404 = vmatprep.subr.mxu0 0.0
    %1405 = vmatpush1.msra.mxu0 %v1099
    %1406 = vmatprep.subr.mxu0 0.0
    %1407 = vmatpush1.msra.mxu0 %v1102
    %1408 = vmatprep.subr.mxu0 0.0
    %1409 = vmatpush1.msra.mxu0 %v1105
    %1410 = vmatprep.subr.mxu0 0.0
    %1411 = vmatpush1.msra.mxu0 %v1108
    %1412 = vmatprep.subr.mxu0 0.0
    %1413 = vmatpush1.msra.mxu0 %v1111
    %1414 = vmatprep.subr.mxu0 0.0
    %1415 = vmatpush1.msra.mxu0 %v1114
    %1416 = vmatprep.subr.mxu0 0.0
    %1417 = vmatpush1.msra.mxu0 %v1117
    %1418 = vmatprep.subr.mxu0 0.0
    %1419 = vmatpush1.msra.mxu0 %v1120
    %1420 = vmatprep.subr.mxu0 0.0
    %1421 = vmatpush1.msra.mxu0 0.0
    %1422 = vmatprep.subr.mxu0 0.0
    %1423 = vmatpush1.msra.mxu0 0.0
    %1424 = vmatprep.subr.mxu0 0.0
    %1425 = vmatpush1.msra.mxu0 0.0
    %1426 = vmatprep.subr.mxu0 0.0
    %1427 = vmatpush1.msra.mxu0 0.0
    %1428 = vmatprep.subr.mxu0 0.0
    %1429 = vmatpush1.msra.mxu0 0.0
    %1430 = vmatprep.subr.mxu0 0.0
    %1431 = vmatpush1.msra.mxu0 0.0
    %1432 = vmatprep.subr.mxu0 0.0
    %1433 = vmatpush1.msra.mxu0 0.0
    %1434 = vmatprep.subr.mxu0 0.0
    %1435 = vmatpush1.msra.mxu0 0.0
    %1436 = vmatprep.subr.mxu0 0.0
    %1437 = vmatpush1.msra.mxu0 0.0
    %1438 = vmatprep.subr.mxu0 0.0
    %1439 = vmatpush1.msra.mxu0 0.0
    %1440 = vmatprep.subr.mxu0 0.0
    %1441 = vmatpush1.msra.mxu0 0.0
    %1442 = vmatprep.subr.mxu0 0.0
    %1443 = vmatpush1.msra.mxu0 0.0
    %1444 = vmatprep.subr.mxu0 0.0
    %1445 = vmatpush1.msra.mxu0 0.0
    %1446 = vmatprep.subr.mxu0 0.0
    %1447 = vmatpush1.msra.mxu0 0.0
    %1448 = vmatprep.subr.mxu0 0.0
    %1449 = vmatpush1.msra.mxu0 0.0
    %1450 = vmatprep.subr.mxu0 0.0
    %1451 = vmatpush1.msra.mxu0 0.0
    %1452 = vmatprep.mubr.f32.mxu0 0.0
    %1453 = vmatmul.mubr.f32.gmra.mrb[0].mxu0 %v1316
    %v1454 = vpop.f32.mrb[0].mxu0
    %v1455 = vadd.f32 0.0, %v1454
    %v1456 = vpop.f32.mrb[0].mxu0
    %1457 = vdwg.mxu0
    %v1458 = vadd.f32 %v1208, %v1384
    %v1459 = vxor.u32 %v1458, 2147483648
    %v1460 = vmul.f32 %v1459, 1.442695
    %v1461 = vpow.pop %v1460
    %v1462 = vadd.f32 %v1461, 1.0
    %v1463 = vrcp.pop %v1462
    %v1464 = vmul.f32 1.0, %v1463
    %v1465 = vadd.f32 %v1210, %v1386
    %v1466 = vxor.u32 %v1465, 2147483648
    %v1467 = vmul.f32 %v1466, 1.442695
    %v1468 = vpow.pop %v1467
    %v1469 = vadd.f32 %v1468, 1.0
    %v1470 = vrcp.pop %v1469
    %v1471 = vmul.f32 1.0, %v1470
    %v1473 = vlaneseq
    %v1474 = vshrl.u32 %v1473, 7
    %v1475 = vsub.s32 0, %v1474
    %v1476 = vrot.slane %v1124, %v1475
    %v1478 = vadd.f32 %v1455, %v1476
    %v1479 = vmul.f32 %v1464, %v1478
    %v1480 = vadd.f32 %v1297, %v1479
    %v1481 = vtanh.pop %v1480
    %v1482 = vsub.f32 1.0, %v1471
    %v1483 = vmul.f32 %v1482, %v1481
    %v1484 = vmul.f32 %v1471, %v1316
    %v1485 = vadd.f32 %v1483, %v1484
    %1486 = vmatprep.subr.mxu0 %v1074
    %1487 = vmatpush1.msra.mxu0 %v1073
    %1488 = vmatprep.subr.mxu0 %v1077
    %1489 = vmatpush1.msra.mxu0 %v1076
    %1490 = vmatprep.subr.mxu0 %v1080
    %1491 = vmatpush1.msra.mxu0 %v1079
    %1492 = vmatprep.subr.mxu0 %v1083
    %1493 = vmatpush1.msra.mxu0 %v1082
    %1494 = vmatprep.subr.mxu0 %v1086
    %1495 = vmatpush1.msra.mxu0 %v1085
    %1496 = vmatprep.subr.mxu0 %v1089
    %1497 = vmatpush1.msra.mxu0 %v1088
    %1498 = vmatprep.subr.mxu0 %v1092
    %1499 = vmatpush1.msra.mxu0 %v1091
    %1500 = vmatprep.subr.mxu0 %v1095
    %1501 = vmatpush1.msra.mxu0 %v1094
    %1502 = vmatprep.subr.mxu0 %v1098
    %1503 = vmatpush1.msra.mxu0 %v1097
    %1504 = vmatprep.subr.mxu0 %v1101
    %1505 = vmatpush1.msra.mxu0 %v1100
    %1506 = vmatprep.subr.mxu0 %v1104
    %1507 = vmatpush1.msra.mxu0 %v1103
    %1508 = vmatprep.subr.mxu0 %v1107
    %1509 = vmatpush1.msra.mxu0 %v1106
    %1510 = vmatprep.subr.mxu0 %v1110
    %1511 = vmatpush1.msra.mxu0 %v1109
    %1512 = vmatprep.subr.mxu0 %v1113
    %1513 = vmatpush1.msra.mxu0 %v1112
    %1514 = vmatprep.subr.mxu0 %v1116
    %1515 = vmatpush1.msra.mxu0 %v1115
    %1516 = vmatprep.subr.mxu0 %v1119
    %1517 = vmatpush1.msra.mxu0 %v1118
    %1518 = vmatprep.subr.mxu0 0.0
    %1519 = vmatpush1.msra.mxu0 0.0
    %1520 = vmatprep.subr.mxu0 0.0
    %1521 = vmatpush1.msra.mxu0 0.0
    %1522 = vmatprep.subr.mxu0 0.0
    %1523 = vmatpush1.msra.mxu0 0.0
    %1524 = vmatprep.subr.mxu0 0.0
    %1525 = vmatpush1.msra.mxu0 0.0
    %1526 = vmatprep.subr.mxu0 0.0
    %1527 = vmatpush1.msra.mxu0 0.0
    %1528 = vmatprep.subr.mxu0 0.0
    %1529 = vmatpush1.msra.mxu0 0.0
    %1530 = vmatprep.subr.mxu0 0.0
    %1531 = vmatpush1.msra.mxu0 0.0
    %1532 = vmatprep.subr.mxu0 0.0
    %1533 = vmatpush1.msra.mxu0 0.0
    %1534 = vmatprep.subr.mxu0 0.0
    %1535 = vmatpush1.msra.mxu0 0.0
    %1536 = vmatprep.subr.mxu0 0.0
    %1537 = vmatpush1.msra.mxu0 0.0
    %1538 = vmatprep.subr.mxu0 0.0
    %1539 = vmatpush1.msra.mxu0 0.0
    %1540 = vmatprep.subr.mxu0 0.0
    %1541 = vmatpush1.msra.mxu0 0.0
    %1542 = vmatprep.subr.mxu0 0.0
    %1543 = vmatpush1.msra.mxu0 0.0
    %1544 = vmatprep.subr.mxu0 0.0
    %1545 = vmatpush1.msra.mxu0 0.0
    %1546 = vmatprep.subr.mxu0 0.0
    %1547 = vmatpush1.msra.mxu0 0.0
    %1548 = vmatprep.subr.mxu0 0.0
    %1549 = vmatpush1.msra.mxu0 0.0
    %1550 = vmatprep.mubr.f32.mxu0 0.0
    %1551 = vmatmul.mubr.f32.gmra.mrb[0].mxu0 %v1485
    %v1552 = vpop.f32.mrb[0].mxu0
    %v1553 = vadd.f32 0.0, %v1552
    %v1554 = vpop.f32.mrb[0].mxu0
    %v1555 = vadd.f32 0.0, %v1554
    %1556 = vdwg.mxu0
    %1557 = vmatprep.subr.mxu0 0.0
    %1558 = vmatpush1.msra.mxu0 %v1075
    %1559 = vmatprep.subr.mxu0 0.0
    %1560 = vmatpush1.msra.mxu0 %v1078
    %1561 = vmatprep.subr.mxu0 0.0
    %1562 = vmatpush1.msra.mxu0 %v1081
    %1563 = vmatprep.subr.mxu0 0.0
    %1564 = vmatpush1.msra.mxu0 %v1084
    %1565 = vmatprep.subr.mxu0 0.0
    %1566 = vmatpush1.msra.mxu0 %v1087
    %1567 = vmatprep.subr.mxu0 0.0
    %1568 = vmatpush1.msra.mxu0 %v1090
    %1569 = vmatprep.subr.mxu0 0.0
    %1570 = vmatpush1.msra.mxu0 %v1093
    %1571 = vmatprep.subr.mxu0 0.0
    %1572 = vmatpush1.msra.mxu0 %v1096
    %1573 = vmatprep.subr.mxu0 0.0
    %1574 = vmatpush1.msra.mxu0 %v1099
    %1575 = vmatprep.subr.mxu0 0.0
    %1576 = vmatpush1.msra.mxu0 %v1102
    %1577 = vmatprep.subr.mxu0 0.0
    %1578 = vmatpush1.msra.mxu0 %v1105
    %1579 = vmatprep.subr.mxu0 0.0
    %1580 = vmatpush1.msra.mxu0 %v1108
    %1581 = vmatprep.subr.mxu0 0.0
    %1582 = vmatpush1.msra.mxu0 %v1111
    %1583 = vmatprep.subr.mxu0 0.0
    %1584 = vmatpush1.msra.mxu0 %v1114
    %1585 = vmatprep.subr.mxu0 0.0
    %1586 = vmatpush1.msra.mxu0 %v1117
    %1587 = vmatprep.subr.mxu0 0.0
    %1588 = vmatpush1.msra.mxu0 %v1120
    %1589 = vmatprep.subr.mxu0 0.0
    %1590 = vmatpush1.msra.mxu0 0.0
    %1591 = vmatprep.subr.mxu0 0.0
    %1592 = vmatpush1.msra.mxu0 0.0
    %1593 = vmatprep.subr.mxu0 0.0
    %1594 = vmatpush1.msra.mxu0 0.0
    %1595 = vmatprep.subr.mxu0 0.0
    %1596 = vmatpush1.msra.mxu0 0.0
    %1597 = vmatprep.subr.mxu0 0.0
    %1598 = vmatpush1.msra.mxu0 0.0
    %1599 = vmatprep.subr.mxu0 0.0
    %1600 = vmatpush1.msra.mxu0 0.0
    %1601 = vmatprep.subr.mxu0 0.0
    %1602 = vmatpush1.msra.mxu0 0.0
    %1603 = vmatprep.subr.mxu0 0.0
    %1604 = vmatpush1.msra.mxu0 0.0
    %1605 = vmatprep.subr.mxu0 0.0
    %1606 = vmatpush1.msra.mxu0 0.0
    %1607 = vmatprep.subr.mxu0 0.0
    %1608 = vmatpush1.msra.mxu0 0.0
    %1609 = vmatprep.subr.mxu0 0.0
    %1610 = vmatpush1.msra.mxu0 0.0
    %1611 = vmatprep.subr.mxu0 0.0
    %1612 = vmatpush1.msra.mxu0 0.0
    %1613 = vmatprep.subr.mxu0 0.0
    %1614 = vmatpush1.msra.mxu0 0.0
    %1615 = vmatprep.subr.mxu0 0.0
    %1616 = vmatpush1.msra.mxu0 0.0
    %1617 = vmatprep.subr.mxu0 0.0
    %1618 = vmatpush1.msra.mxu0 0.0
    %1619 = vmatprep.subr.mxu0 0.0
    %1620 = vmatpush1.msra.mxu0 0.0
    %1621 = vmatprep.mubr.f32.mxu0 0.0
    %1622 = vmatmul.mubr.f32.gmra.mrb[0].mxu0 %v1485
    %v1623 = vpop.f32.mrb[0].mxu0
    %v1624 = vadd.f32 0.0, %v1623
    %v1625 = vpop.f32.mrb[0].mxu0
    %1626 = vdwg.mxu0
    %v1627 = vadd.f32 %v1214, %v1553
    %v1628 = vxor.u32 %v1627, 2147483648
    %v1629 = vmul.f32 %v1628, 1.442695
    %v1630 = vpow.pop %v1629
    %v1631 = vadd.f32 %v1630, 1.0
    %v1632 = vrcp.pop %v1631
    %v1633 = vmul.f32 1.0, %v1632
    %v1634 = vadd.f32 %v1216, %v1555
    %v1635 = vxor.u32 %v1634, 2147483648
    %v1636 = vmul.f32 %v1635, 1.442695
    %v1637 = vpow.pop %v1636
    %v1638 = vadd.f32 %v1637, 1.0
    %v1639 = vrcp.pop %v1638
    %v1640 = vmul.f32 1.0, %v1639
    %v1641 = vadd.f32 %v1624, %v1476
    %v1642 = vmul.f32 %v1633, %v1641
    %v1643 = vadd.f32 %v1302, %v1642
    %v1644 = vtanh.pop %v1643
    %v1645 = vsub.f32 1.0, %v1640
    %v1646 = vmul.f32 %v1645, %v1644
    %v1647 = vmul.f32 %v1640, %v1485
    %v1648 = vadd.f32 %v1646, %v1647
    %1649 = vmatprep.subr.mxu0 %v1074
    %1650 = vmatpush1.msra.mxu0 %v1073
    %1651 = vmatprep.subr.mxu0 %v1077
    %1652 = vmatpush1.msra.mxu0 %v1076
    %1653 = vmatprep.subr.mxu0 %v1080
    %1654 = vmatpush1.msra.mxu0 %v1079
    %1655 = vmatprep.subr.mxu0 %v1083
    %1656 = vmatpush1.msra.mxu0 %v1082
    %1657 = vmatprep.subr.mxu0 %v1086
    %1658 = vmatpush1.msra.mxu0 %v1085
    %1659 = vmatprep.subr.mxu0 %v1089
    %1660 = vmatpush1.msra.mxu0 %v1088
    %1661 = vmatprep.subr.mxu0 %v1092
    %1662 = vmatpush1.msra.mxu0 %v1091
    %1663 = vmatprep.subr.mxu0 %v1095
    %1664 = vmatpush1.msra.mxu0 %v1094
    %1665 = vmatprep.subr.mxu0 %v1098
    %1666 = vmatpush1.msra.mxu0 %v1097
    %1667 = vmatprep.subr.mxu0 %v1101
    %1668 = vmatpush1.msra.mxu0 %v1100
    %1669 = vmatprep.subr.mxu0 %v1104
    %1670 = vmatpush1.msra.mxu0 %v1103
    %1671 = vmatprep.subr.mxu0 %v1107
    %1672 = vmatpush1.msra.mxu0 %v1106
    %1673 = vmatprep.subr.mxu0 %v1110
    %1674 = vmatpush1.msra.mxu0 %v1109
    %1675 = vmatprep.subr.mxu0 %v1113
    %1676 = vmatpush1.msra.mxu0 %v1112
    %1677 = vmatprep.subr.mxu0 %v1116
    %1678 = vmatpush1.msra.mxu0 %v1115
    %1679 = vmatprep.subr.mxu0 %v1119
    %1680 = vmatpush1.msra.mxu0 %v1118
    %1681 = vmatprep.subr.mxu0 0.0
    %1682 = vmatpush1.msra.mxu0 0.0
    %1683 = vmatprep.subr.mxu0 0.0
    %1684 = vmatpush1.msra.mxu0 0.0
    %1685 = vmatprep.subr.mxu0 0.0
    %1686 = vmatpush1.msra.mxu0 0.0
    %1687 = vmatprep.subr.mxu0 0.0
    %1688 = vmatpush1.msra.mxu0 0.0
    %1689 = vmatprep.subr.mxu0 0.0
    %1690 = vmatpush1.msra.mxu0 0.0
    %1691 = vmatprep.subr.mxu0 0.0
    %1692 = vmatpush1.msra.mxu0 0.0
    %1693 = vmatprep.subr.mxu0 0.0
    %1694 = vmatpush1.msra.mxu0 0.0
    %1695 = vmatprep.subr.mxu0 0.0
    %1696 = vmatpush1.msra.mxu0 0.0
    %1697 = vmatprep.subr.mxu0 0.0
    %1698 = vmatpush1.msra.mxu0 0.0
    %1699 = vmatprep.subr.mxu0 0.0
    %1700 = vmatpush1.msra.mxu0 0.0
    %1701 = vmatprep.subr.mxu0 0.0
    %1702 = vmatpush1.msra.mxu0 0.0
    %1703 = vmatprep.subr.mxu0 0.0
    %1704 = vmatpush1.msra.mxu0 0.0
    %1705 = vmatprep.subr.mxu0 0.0
    %1706 = vmatpush1.msra.mxu0 0.0
    %1707 = vmatprep.subr.mxu0 0.0
    %1708 = vmatpush1.msra.mxu0 0.0
    %1709 = vmatprep.subr.mxu0 0.0
    %1710 = vmatpush1.msra.mxu0 0.0
    %1711 = vmatprep.subr.mxu0 0.0
    %1712 = vmatpush1.msra.mxu0 0.0
    %1713 = vmatprep.mubr.f32.mxu0 0.0
    %1714 = vmatmul.mubr.f32.gmra.mrb[0].mxu0 %v1648
    %v1715 = vpop.f32.mrb[0].mxu0
    %v1716 = vadd.f32 0.0, %v1715
    %v1717 = vpop.f32.mrb[0].mxu0
    %v1718 = vadd.f32 0.0, %v1717
    %1719 = vdwg.mxu0
    %1720 = vmatprep.subr.mxu0 0.0
    %1721 = vmatpush1.msra.mxu0 %v1075
    %1722 = vmatprep.subr.mxu0 0.0
    %1723 = vmatpush1.msra.mxu0 %v1078
    %1724 = vmatprep.subr.mxu0 0.0
    %1725 = vmatpush1.msra.mxu0 %v1081
    %1726 = vmatprep.subr.mxu0 0.0
    %1727 = vmatpush1.msra.mxu0 %v1084
    %1728 = vmatprep.subr.mxu0 0.0
    %1729 = vmatpush1.msra.mxu0 %v1087
    %1730 = vmatprep.subr.mxu0 0.0
    %1731 = vmatpush1.msra.mxu0 %v1090
    %1732 = vmatprep.subr.mxu0 0.0
    %1733 = vmatpush1.msra.mxu0 %v1093
    %1734 = vmatprep.subr.mxu0 0.0
    %1735 = vmatpush1.msra.mxu0 %v1096
    %1736 = vmatprep.subr.mxu0 0.0
    %1737 = vmatpush1.msra.mxu0 %v1099
    %1738 = vmatprep.subr.mxu0 0.0
    %1739 = vmatpush1.msra.mxu0 %v1102
    %1740 = vmatprep.subr.mxu0 0.0
    %1741 = vmatpush1.msra.mxu0 %v1105
    %1742 = vmatprep.subr.mxu0 0.0
    %1743 = vmatpush1.msra.mxu0 %v1108
    %1744 = vmatprep.subr.mxu0 0.0
    %1745 = vmatpush1.msra.mxu0 %v1111
    %1746 = vmatprep.subr.mxu0 0.0
    %1747 = vmatpush1.msra.mxu0 %v1114
    %1748 = vmatprep.subr.mxu0 0.0
    %1749 = vmatpush1.msra.mxu0 %v1117
    %1750 = vmatprep.subr.mxu0 0.0
    %1751 = vmatpush1.msra.mxu0 %v1120
    %1752 = vmatprep.subr.mxu0 0.0
    %1753 = vmatpush1.msra.mxu0 0.0
    %1754 = vmatprep.subr.mxu0 0.0
    %1755 = vmatpush1.msra.mxu0 0.0
    %1756 = vmatprep.subr.mxu0 0.0
    %1757 = vmatpush1.msra.mxu0 0.0
    %1758 = vmatprep.subr.mxu0 0.0
    %1759 = vmatpush1.msra.mxu0 0.0
    %1760 = vmatprep.subr.mxu0 0.0
    %1761 = vmatpush1.msra.mxu0 0.0
    %1762 = vmatprep.subr.mxu0 0.0
    %1763 = vmatpush1.msra.mxu0 0.0
    %1764 = vmatprep.subr.mxu0 0.0
    %1765 = vmatpush1.msra.mxu0 0.0
    %1766 = vmatprep.subr.mxu0 0.0
    %1767 = vmatpush1.msra.mxu0 0.0
    %1768 = vmatprep.subr.mxu0 0.0
    %1769 = vmatpush1.msra.mxu0 0.0
    %1770 = vmatprep.subr.mxu0 0.0
    %1771 = vmatpush1.msra.mxu0 0.0
    %1772 = vmatprep.subr.mxu0 0.0
    %1773 = vmatpush1.msra.mxu0 0.0
    %1774 = vmatprep.subr.mxu0 0.0
    %1775 = vmatpush1.msra.mxu0 0.0
    %1776 = vmatprep.subr.mxu0 0.0
    %1777 = vmatpush1.msra.mxu0 0.0
    %1778 = vmatprep.subr.mxu0 0.0
    %1779 = vmatpush1.msra.mxu0 0.0
    %1780 = vmatprep.subr.mxu0 0.0
    %1781 = vmatpush1.msra.mxu0 0.0
    %1782 = vmatprep.subr.mxu0 0.0
    %1783 = vmatpush1.msra.mxu0 0.0
    %1784 = vmatprep.mubr.f32.mxu0 0.0
    %1785 = vmatmul.mubr.f32.gmra.mrb[0].mxu0 %v1648
    %v1786 = vpop.f32.mrb[0].mxu0
    %v1787 = vadd.f32 0.0, %v1786
    %v1788 = vpop.f32.mrb[0].mxu0
    %1789 = vdwg.mxu0
    %v1790 = vadd.f32 %v1220, %v1716
    %v1791 = vxor.u32 %v1790, 2147483648
    %v1792 = vmul.f32 %v1791, 1.442695
    %v1793 = vpow.pop %v1792
    %v1794 = vadd.f32 %v1793, 1.0
    %v1795 = vrcp.pop %v1794
    %v1796 = vmul.f32 1.0, %v1795
    %v1797 = vadd.f32 %v1222, %v1718
    %v1798 = vxor.u32 %v1797, 2147483648
    %v1799 = vmul.f32 %v1798, 1.442695
    %v1800 = vpow.pop %v1799
    %v1801 = vadd.f32 %v1800, 1.0
    %v1802 = vrcp.pop %v1801
    %v1803 = vmul.f32 1.0, %v1802
    %v1804 = vadd.f32 %v1787, %v1476
    %v1805 = vmul.f32 %v1796, %v1804
    %v1806 = vadd.f32 %v1307, %v1805
    %v1807 = vtanh.pop %v1806
    %v1808 = vsub.f32 1.0, %v1803
    %v1809 = vmul.f32 %v1808, %v1807
    %v1810 = vmul.f32 %v1803, %v1648
    %v1811 = vadd.f32 %v1809, %v1810
    %1812 = vmatprep.subr.mxu0 %v1074
    %1813 = vmatpush1.msra.mxu0 %v1073
    %1814 = vmatprep.subr.mxu0 %v1077
    %1815 = vmatpush1.msra.mxu0 %v1076
    %1816 = vmatprep.subr.mxu0 %v1080
    %1817 = vmatpush1.msra.mxu0 %v1079
    %1818 = vmatprep.subr.mxu0 %v1083
    %1819 = vmatpush1.msra.mxu0 %v1082
    %1820 = vmatprep.subr.mxu0 %v1086
    %1821 = vmatpush1.msra.mxu0 %v1085
    %1822 = vmatprep.subr.mxu0 %v1089
    %1823 = vmatpush1.msra.mxu0 %v1088
    %1824 = vmatprep.subr.mxu0 %v1092
    %1825 = vmatpush1.msra.mxu0 %v1091
    %1826 = vmatprep.subr.mxu0 %v1095
    %1827 = vmatpush1.msra.mxu0 %v1094
    %1828 = vmatprep.subr.mxu0 %v1098
    %1829 = vmatpush1.msra.mxu0 %v1097
    %1830 = vmatprep.subr.mxu0 %v1101
    %1831 = vmatpush1.msra.mxu0 %v1100
    %1832 = vmatprep.subr.mxu0 %v1104
    %1833 = vmatpush1.msra.mxu0 %v1103
    %1834 = vmatprep.subr.mxu0 %v1107
    %1835 = vmatpush1.msra.mxu0 %v1106
    %1836 = vmatprep.subr.mxu0 %v1110
    %1837 = vmatpush1.msra.mxu0 %v1109
    %1838 = vmatprep.subr.mxu0 %v1113
    %1839 = vmatpush1.msra.mxu0 %v1112
    %1840 = vmatprep.subr.mxu0 %v1116
    %1841 = vmatpush1.msra.mxu0 %v1115
    %1842 = vmatprep.subr.mxu0 %v1119
    %1843 = vmatpush1.msra.mxu0 %v1118
    %1844 = vmatprep.subr.mxu0 0.0
    %1845 = vmatpush1.msra.mxu0 0.0
    %1846 = vmatprep.subr.mxu0 0.0
    %1847 = vmatpush1.msra.mxu0 0.0
    %1848 = vmatprep.subr.mxu0 0.0
    %1849 = vmatpush1.msra.mxu0 0.0
    %1850 = vmatprep.subr.mxu0 0.0
    %1851 = vmatpush1.msra.mxu0 0.0
    %1852 = vmatprep.subr.mxu0 0.0
    %1853 = vmatpush1.msra.mxu0 0.0
    %1854 = vmatprep.subr.mxu0 0.0
    %1855 = vmatpush1.msra.mxu0 0.0
    %1856 = vmatprep.subr.mxu0 0.0
    %1857 = vmatpush1.msra.mxu0 0.0
    %1858 = vmatprep.subr.mxu0 0.0
    %1859 = vmatpush1.msra.mxu0 0.0
    %1860 = vmatprep.subr.mxu0 0.0
    %1861 = vmatpush1.msra.mxu0 0.0
    %1862 = vmatprep.subr.mxu0 0.0
    %1863 = vmatpush1.msra.mxu0 0.0
    %1864 = vmatprep.subr.mxu0 0.0
    %1865 = vmatpush1.msra.mxu0 0.0
    %1866 = vmatprep.subr.mxu0 0.0
    %1867 = vmatpush1.msra.mxu0 0.0
    %1868 = vmatprep.subr.mxu0 0.0
    %1869 = vmatpush1.msra.mxu0 0.0
    %1870 = vmatprep.subr.mxu0 0.0
    %1871 = vmatpush1.msra.mxu0 0.0
    %1872 = vmatprep.subr.mxu0 0.0
    %1873 = vmatpush1.msra.mxu0 0.0
    %1874 = vmatprep.subr.mxu0 0.0
    %1875 = vmatpush1.msra.mxu0 0.0
    %1876 = vmatprep.mubr.f32.mxu0 0.0
    %1877 = vmatmul.mubr.f32.gmra.mrb[0].mxu0 %v1811
    %v1878 = vpop.f32.mrb[0].mxu0
    %v1879 = vadd.f32 0.0, %v1878
    %v1880 = vpop.f32.mrb[0].mxu0
    %v1881 = vadd.f32 0.0, %v1880
    %1882 = vdwg.mxu0
    %1883 = vmatprep.subr.mxu0 0.0
    %1884 = vmatpush1.msra.mxu0 %v1075
    %1885 = vmatprep.subr.mxu0 0.0
    %1886 = vmatpush1.msra.mxu0 %v1078
    %1887 = vmatprep.subr.mxu0 0.0
    %1888 = vmatpush1.msra.mxu0 %v1081
    %1889 = vmatprep.subr.mxu0 0.0
    %1890 = vmatpush1.msra.mxu0 %v1084
    %1891 = vmatprep.subr.mxu0 0.0
    %1892 = vmatpush1.msra.mxu0 %v1087
    %1893 = vmatprep.subr.mxu0 0.0
    %1894 = vmatpush1.msra.mxu0 %v1090
    %1895 = vmatprep.subr.mxu0 0.0
    %1896 = vmatpush1.msra.mxu0 %v1093
    %1897 = vmatprep.subr.mxu0 0.0
    %1898 = vmatpush1.msra.mxu0 %v1096
    %1899 = vmatprep.subr.mxu0 0.0
    %1900 = vmatpush1.msra.mxu0 %v1099
    %1901 = vmatprep.subr.mxu0 0.0
    %1902 = vmatpush1.msra.mxu0 %v1102
    %1903 = vmatprep.subr.mxu0 0.0
    %1904 = vmatpush1.msra.mxu0 %v1105
    %1905 = vmatprep.subr.mxu0 0.0
    %1906 = vmatpush1.msra.mxu0 %v1108
    %1907 = vmatprep.subr.mxu0 0.0
    %1908 = vmatpush1.msra.mxu0 %v1111
    %1909 = vmatprep.subr.mxu0 0.0
    %1910 = vmatpush1.msra.mxu0 %v1114
    %1911 = vmatprep.subr.mxu0 0.0
    %1912 = vmatpush1.msra.mxu0 %v1117
    %1913 = vmatprep.subr.mxu0 0.0
    %1914 = vmatpush1.msra.mxu0 %v1120
    %1915 = vmatprep.subr.mxu0 0.0
    %1916 = vmatpush1.msra.mxu0 0.0
    %1917 = vmatprep.subr.mxu0 0.0
    %1918 = vmatpush1.msra.mxu0 0.0
    %1919 = vmatprep.subr.mxu0 0.0
    %1920 = vmatpush1.msra.mxu0 0.0
    %1921 = vmatprep.subr.mxu0 0.0
    %1922 = vmatpush1.msra.mxu0 0.0
    %1923 = vmatprep.subr.mxu0 0.0
    %1924 = vmatpush1.msra.mxu0 0.0
    %1925 = vmatprep.subr.mxu0 0.0
    %1926 = vmatpush1.msra.mxu0 0.0
    %1927 = vmatprep.subr.mxu0 0.0
    %1928 = vmatpush1.msra.mxu0 0.0
    %1929 = vmatprep.subr.mxu0 0.0
    %1930 = vmatpush1.msra.mxu0 0.0
    %1931 = vmatprep.subr.mxu0 0.0
    %1932 = vmatpush1.msra.mxu0 0.0
    %1933 = vmatprep.subr.mxu0 0.0
    %1934 = vmatpush1.msra.mxu0 0.0
    %1935 = vmatprep.subr.mxu0 0.0
    %1936 = vmatpush1.msra.mxu0 0.0
    %1937 = vmatprep.subr.mxu0 0.0
    %1938 = vmatpush1.msra.mxu0 0.0
    %1939 = vmatprep.subr.mxu0 0.0
    %1940 = vmatpush1.msra.mxu0 0.0
    %1941 = vmatprep.subr.mxu0 0.0
    %1942 = vmatpush1.msra.mxu0 0.0
    %1943 = vmatprep.subr.mxu0 0.0
    %1944 = vmatpush1.msra.mxu0 0.0
    %1945 = vmatprep.subr.mxu0 0.0
    %1946 = vmatpush1.msra.mxu0 0.0
    %1947 = vmatprep.mubr.f32.mxu0 0.0
    %1948 = vmatmul.mubr.f32.gmra.mrb[0].mxu0 %v1811
    %v1949 = vpop.f32.mrb[0].mxu0
    %v1950 = vadd.f32 0.0, %v1949
    %v1951 = vpop.f32.mrb[0].mxu0
    %1952 = vdwg.mxu0
    %v1953 = vadd.f32 %v1226, %v1879
    %v1954 = vxor.u32 %v1953, 2147483648
    %v1955 = vmul.f32 %v1954, 1.442695
    %v1956 = vpow.pop %v1955
    %v1957 = vadd.f32 %v1956, 1.0
    %v1958 = vrcp.pop %v1957
    %v1959 = vmul.f32 1.0, %v1958
    %v1960 = vadd.f32 %v1228, %v1881
    %v1961 = vxor.u32 %v1960, 2147483648
    %v1962 = vmul.f32 %v1961, 1.442695
    %v1963 = vpow.pop %v1962
    %v1964 = vadd.f32 %v1963, 1.0
    %v1965 = vrcp.pop %v1964
    %v1966 = vmul.f32 1.0, %v1965
    %v1967 = vadd.f32 %v1950, %v1476
    %v1968 = vmul.f32 %v1959, %v1967
    %v1969 = vadd.f32 %v1312, %v1968
    %v1970 = vtanh.pop %v1969
    %v1971 = vsub.f32 1.0, %v1966
    %v1972 = vmul.f32 %v1971, %v1970
    %v1973 = vmul.f32 %v1966, %v1811
    %v1974 = vadd.f32 %v1972, %v1973
    %s1975 = scalar_lea.vmem %s9, 8
    %1976 = vst [vmem:[%s1975] sm:$0xff] %v1974
    %v1977 = vld [vmem:[%s6] sm:$0xff]
    %v1978 = vld [vmem:[%s6 + $0x8] sm:$0xff]
    %v1979 = vld [vmem:[%s6 + $0x10] sm:$0xff]
    %v1980 = vld [vmem:[%s6 + $0x18] sm:$0xff]
    %v1981 = vld [vmem:[%s6 + $0x20] sm:$0xff]
    %v1982 = vld [vmem:[%s6 + $0x28] sm:$0xff]
    %v1983 = vld [vmem:[%s6 + $0x30] sm:$0xff]
    %v1984 = vld [vmem:[%s6 + $0x38] sm:$0xff]
    %v1985 = vld [vmem:[%s6 + $0x40] sm:$0xff]
    %v1986 = vld [vmem:[%s6 + $0x48] sm:$0xff]
    %v1987 = vld [vmem:[%s6 + $0x50] sm:$0xff]
    %v1988 = vld [vmem:[%s6 + $0x58] sm:$0xff]
    %v1989 = vld [vmem:[%s6 + $0x60] sm:$0xff]
    %v1990 = vld [vmem:[%s6 + $0x68] sm:$0xff]
    %v1991 = vld [vmem:[%s6 + $0x70] sm:$0xff]
    %v1992 = vld [vmem:[%s6 + $0x78] sm:$0xff]
    %v1993 = vld [vmem:[%s7] sm:$0x1]
    %v1995 = vlaneseq
    %v1996 = vshrl.u32 %v1995, 7
    %v1997 = vsub.s32 0, %v1996
    %v1998 = vrot.slane %v1993, %v1997
    %2000 = vmatprep.subr.mxu0 0.0
    %2001 = vmatpush1.msra.mxu0 %v1977
    %2002 = vmatprep.subr.mxu0 0.0
    %2003 = vmatpush1.msra.mxu0 %v1978
    %2004 = vmatprep.subr.mxu0 0.0
    %2005 = vmatpush1.msra.mxu0 %v1979
    %2006 = vmatprep.subr.mxu0 0.0
    %2007 = vmatpush1.msra.mxu0 %v1980
    %2008 = vmatprep.subr.mxu0 0.0
    %2009 = vmatpush1.msra.mxu0 %v1981
    %2010 = vmatprep.subr.mxu0 0.0
    %2011 = vmatpush1.msra.mxu0 %v1982
    %2012 = vmatprep.subr.mxu0 0.0
    %2013 = vmatpush1.msra.mxu0 %v1983
    %2014 = vmatprep.subr.mxu0 0.0
    %2015 = vmatpush1.msra.mxu0 %v1984
    %2016 = vmatprep.subr.mxu0 0.0
    %2017 = vmatpush1.msra.mxu0 %v1985
    %2018 = vmatprep.subr.mxu0 0.0
    %2019 = vmatpush1.msra.mxu0 %v1986
    %2020 = vmatprep.subr.mxu0 0.0
    %2021 = vmatpush1.msra.mxu0 %v1987
    %2022 = vmatprep.subr.mxu0 0.0
    %2023 = vmatpush1.msra.mxu0 %v1988
    %2024 = vmatprep.subr.mxu0 0.0
    %2025 = vmatpush1.msra.mxu0 %v1989
    %2026 = vmatprep.subr.mxu0 0.0
    %2027 = vmatpush1.msra.mxu0 %v1990
    %2028 = vmatprep.subr.mxu0 0.0
    %2029 = vmatpush1.msra.mxu0 %v1991
    %2030 = vmatprep.subr.mxu0 0.0
    %2031 = vmatpush1.msra.mxu0 %v1992
    %2032 = vmatprep.subr.mxu0 0.0
    %2033 = vmatpush1.msra.mxu0 0.0
    %2034 = vmatprep.subr.mxu0 0.0
    %2035 = vmatpush1.msra.mxu0 0.0
    %2036 = vmatprep.subr.mxu0 0.0
    %2037 = vmatpush1.msra.mxu0 0.0
    %2038 = vmatprep.subr.mxu0 0.0
    %2039 = vmatpush1.msra.mxu0 0.0
    %2040 = vmatprep.subr.mxu0 0.0
    %2041 = vmatpush1.msra.mxu0 0.0
    %2042 = vmatprep.subr.mxu0 0.0
    %2043 = vmatpush1.msra.mxu0 0.0
    %2044 = vmatprep.subr.mxu0 0.0
    %2045 = vmatpush1.msra.mxu0 0.0
    %2046 = vmatprep.subr.mxu0 0.0
    %2047 = vmatpush1.msra.mxu0 0.0
    %2048 = vmatprep.subr.mxu0 0.0
    %2049 = vmatpush1.msra.mxu0 0.0
    %2050 = vmatprep.subr.mxu0 0.0
    %2051 = vmatpush1.msra.mxu0 0.0
    %2052 = vmatprep.subr.mxu0 0.0
    %2053 = vmatpush1.msra.mxu0 0.0
    %2054 = vmatprep.subr.mxu0 0.0
    %2055 = vmatpush1.msra.mxu0 0.0
    %2056 = vmatprep.subr.mxu0 0.0
    %2057 = vmatpush1.msra.mxu0 0.0
    %2058 = vmatprep.subr.mxu0 0.0
    %2059 = vmatpush1.msra.mxu0 0.0
    %2060 = vmatprep.subr.mxu0 0.0
    %2061 = vmatpush1.msra.mxu0 0.0
    %2062 = vmatprep.subr.mxu0 0.0
    %2063 = vmatpush1.msra.mxu0 0.0
    %2064 = vmatprep.mubr.f32.mxu0 0.0
    %2065 = vmatmul.mubr.f32.gmra.mrb[0].mxu0 %v1485
    %v2066 = vpop.f32.mrb[0].mxu0
    %v2067 = vadd.f32 %v1998, %v2066
    %v2068 = vpop.f32.mrb[0].mxu0
    %2069 = vdwg.mxu0
    %2070 = vmax.xlane.f32.xlu0 %v2067
    %v2071 = vpop.xlane.xlu0 %2070
    %v2072 = vsub.f32 %v2067, %v2071
    %v2073 = vmul.f32 %v2072, 1.442695
    %v2074 = vpow.pop %v2073
    %2075 = vadd.xlane.f32.xlu0 %v2074
    %v2076 = vpop.xlane.xlu0 %2075
    %v2077 = vlog2.pop %v2076
    %v2078 = vmul.f32 %v2077, 0.6931472
    %v2079 = vsub.f32 %v2072, %v2078
    %2080 = vst [vmem:[%s8] sm:$0xff] %v2079
    // Predicated region
    $region42: #{decoder_forward.1} parent=1 // pred_check
      _
    $region43: #{decoder_forward.1} parent=1 // pred_check_branch
      %2082 = sbr.rel (0) target = $region45
    $region44: #{decoder_forward.1} parent=1 // pred_region
      _
    $region45: #{decoder_forward.1} parent=1 // pred_fallthru
      _
    // Predicated region
    $region46: #{decoder_forward.1} parent=1 // pred_check
      _
    $region47: #{decoder_forward.1} parent=1 // pred_check_branch
      %2084 = sbr.rel (0) target = $region49
    $region48: #{decoder_forward.1} parent=1 // pred_region
      _
    $region49: #{decoder_forward.1} parent=1 // pred_fallthru
      _
    // Predicated region
    $region50: #{decoder_forward.1} parent=1 // pred_check
      _
    $region51: #{decoder_forward.1} parent=1 // pred_check_branch
      %2086 = sbr.rel (0) target = $region53
    $region52: #{decoder_forward.1} parent=1 // pred_region
      _
    $region53: #{decoder_forward.1} parent=1 // pred_fallthru
      _
    // Predicated region
    $region54: #{decoder_forward.1} parent=1 // pred_check
      _
    $region55: #{decoder_forward.1} parent=1 // pred_check_branch
      %2088 = sbr.rel (0) target = $region57
    $region56: #{decoder_forward.1} parent=1 // pred_region
      _
    $region57: #{decoder_forward.1} parent=1 // pred_fallthru
      _
    %2089 = vsyncpa [#allocation4], 1
    %2090 = vsyncpa [#allocation6], 1

</llo_original>
